<compile_context>
chip_gen: v5e
topology: v5e:2x2
jax: 0.10.0
libtpu: 0.0.40
codegen_flags: <defaults>
</compile_context>

<pallas_src>
import functools

import jax
import jax.numpy as jnp
from jax.experimental import pallas as pl
from jax.experimental.pallas import tpu as pltpu

# Synthetic vocabulary ("dict_char") size and hidden width (torch.nn.RNN(V, 256)).
VOCAB = 32
HIDDEN = 256

MAX_CHUNK_T = 128  # timesteps per grid step (bounds VMEM use for long sequences)


def rnn_kernel(tok_ref, eprime_ref, whh_ref, wout_ref, bout_ref, out_ref,
               xp_ref, hs_ref, hcarry_ref, *, chunk_t: int, batch_pad: int,
               vocab: int):
    """One time-chunk of:  h_t = tanh(E'[tok_t] + h_{t-1} @ Whh^T)
                           logits_t = h_t @ Wout^T + b_out
    Rows of tok/xp/hs/out are laid out as row = t*BP + b (time-major)."""
    rows = chunk_t * batch_pad

    # Reset the recurrent carry at the first chunk (PyTorch state=None -> zeros).
    @pl.when(pl.program_id(0) == 0)
    def _():
        hcarry_ref[...] = jnp.zeros_like(hcarry_ref)

    # ---- In-kernel embedding gather for the whole chunk (one small matmul) ----
    # one_hot rows are exact {0,1}, so the dot exactly selects rows of the fused
    # table E' (embedding + input projection + both RNN biases).
    toks = tok_ref[...]                                             # (rows, 1) i32
    lane_ids = jax.lax.broadcasted_iota(jnp.int32, (rows, vocab), 1)
    one_hot = (toks == lane_ids).astype(jnp.bfloat16)               # (rows, V)
    xp_ref[...] = jnp.dot(one_hot, eprime_ref[...],
                          preferred_element_type=jnp.float32)       # (rows, H) f32

    # ---- Serial recurrence over this chunk (bf16 MXU operands, f32 math) ----
    def step(t, h):
        row = pl.multiple_of(t * batch_pad, 8)          # sublane-aligned offset
        pre = xp_ref[pl.ds(row, batch_pad)] + jnp.dot(
            h.astype(jnp.bfloat16), whh_ref[...],       # read Whh at use site
            preferred_element_type=jnp.float32)
        h_new = jnp.tanh(pre)                           # f32 carry
        hs_ref[pl.ds(row, batch_pad)] = h_new           # stage for batched proj
        return h_new

    h0 = hcarry_ref[...]
    h_last = jax.lax.fori_loop(0, chunk_t, step, h0, unroll=min(8, chunk_t))
    hcarry_ref[...] = h_last                            # carry to next chunk

    # ---- One batched output projection per chunk, stored at V lanes ----
    out_ref[...] = (jnp.dot(hs_ref[...].astype(jnp.bfloat16), wout_ref[...],
                            preferred_element_type=jnp.float32)
                    + bout_ref[...])


@jax.jit
def rnn_forward(sentences, params):
    """sentences: int32 (B, T).  Returns (B, T, V) float32 logits."""
    embed_w, w_ih, w_hh, b_ih, b_hh, w_out, b_out = params
    B, T = sentences.shape
    V = w_out.shape[0]
    H = w_hh.shape[0]
    BP = ((B + 7) // 8) * 8                      # pad batch to sublane granularity

    chunk_t = T if T <= MAX_CHUNK_T else MAX_CHUNK_T
    TP = ((T + chunk_t - 1) // chunk_t) * chunk_t   # pad T to a chunk multiple
    n_chunks = TP // chunk_t
    rows = chunk_t * BP

    # Fused Embedding + input projection + both RNN biases: tiny (V, H) table.
    eprime = (embed_w.astype(jnp.float32) @ w_ih.T.astype(jnp.float32)
              + (b_ih + b_hh)[None, :]).astype(jnp.bfloat16)

    whh_bf = w_hh.T.astype(jnp.bfloat16)                 # (H, H)
    wout_bf = w_out.T.astype(jnp.bfloat16)               # (H, V) -- unpadded lanes
    bout = b_out.reshape(1, V).astype(jnp.float32)       # (1, V)

    # Token ids only: time-major, batch padded, row = t*BP + b.  This is the
    # kernel's only O(T) HBM input (4 bytes/row instead of 4*H).
    toks = jnp.transpose(sentences, (1, 0)).astype(jnp.int32)   # (T, B)
    toks = jnp.pad(toks, ((0, TP - T), (0, BP - B)))            # (TP, BP)
    toks = toks.reshape(TP * BP, 1)

    kernel = functools.partial(rnn_kernel, chunk_t=chunk_t, batch_pad=BP, vocab=V)

    out2d = pl.pallas_call(
        kernel,
        out_shape=jax.ShapeDtypeStruct((TP * BP, V), jnp.float32),
        grid_spec=pltpu.PrefetchScalarGridSpec(
            num_scalar_prefetch=0,
            grid=(n_chunks,),                                  # time chunks
            in_specs=[
                pl.BlockSpec((rows, 1), lambda c: (c, 0)),     # token ids
                pl.BlockSpec((V, H), lambda c: (0, 0)),        # E' (bf16)
                pl.BlockSpec((H, H), lambda c: (0, 0)),        # Whh^T (bf16)
                pl.BlockSpec((H, V), lambda c: (0, 0)),        # Wout^T (bf16)
                pl.BlockSpec((1, V), lambda c: (0, 0)),        # b_out
            ],
            out_specs=pl.BlockSpec((rows, V), lambda c: (c, 0)),
            scratch_shapes=[
                pltpu.VMEM((rows, H), jnp.float32),   # xp: fused input terms
                pltpu.VMEM((rows, H), jnp.float32),   # hs: staged hidden states
                pltpu.VMEM((BP, H), jnp.float32),     # h carry across chunks
            ]),
        compiler_params=pltpu.CompilerParams(
            dimension_semantics=("arbitrary",),        # recurrence is sequential
            vmem_limit_bytes=32 * 1024 * 1024),
    )(toks, eprime, whh_bf, wout_bf, bout)

    out = out2d.reshape(TP, BP, V)[:T, :B, :]              # strip pads -> (T, B, V)
    return jnp.transpose(out, (1, 0, 2))                   # batch-first (B, T, V)


def init_params(key, vocab=VOCAB, hidden=HIDDEN):
    """Deterministic parameter init mirroring the PyTorch module's shapes."""
    ks = jax.random.split(key, 7)
    bound = 1.0 / jnp.sqrt(hidden)
    embed_w = jax.random.normal(ks[0], (vocab, vocab), jnp.float32)          # Embedding(V, V)
    w_ih = jax.random.uniform(ks[1], (hidden, vocab), jnp.float32, -bound, bound)
    w_hh = jax.random.uniform(ks[2], (hidden, hidden), jnp.float32, -bound, bound)
    b_ih = jax.random.uniform(ks[3], (hidden,), jnp.float32, -bound, bound)
    b_hh = jax.random.uniform(ks[4], (hidden,), jnp.float32, -bound, bound)
    w_out = jax.random.uniform(ks[5], (vocab, hidden), jnp.float32, -bound, bound)
    b_out = jax.random.uniform(ks[6], (vocab,), jnp.float32, -bound, bound)
    return embed_w, w_ih, w_hh, b_ih, b_hh, w_out, b_out


def rnn_forward_ref(sentences, params):
    """Pure-f32 JAX reference (unfused), matches the PyTorch forward."""
    embed_w, w_ih, w_hh, b_ih, b_hh, w_out, b_out = params
    x = jnp.take(embed_w, sentences, axis=0)          # (B, T, V)
    B, T, _ = x.shape
    H = w_hh.shape[0]

    def step(h, x_t):
        h_new = jnp.tanh(x_t @ w_ih.T + h @ w_hh.T + b_ih + b_hh)
        return h_new, h_new

    h0 = jnp.zeros((B, H), jnp.float32)
    _, hs = jax.lax.scan(step, h0, jnp.transpose(x, (1, 0, 2)))   # (T, B, H)
    o = jnp.transpose(hs, (1, 0, 2))                              # (B, T, H)
    return o @ w_out.T + b_out                                    # (B, T, V)


def rnn_forward_ref_bf16(sentences, params):
    """Reference that mirrors the kernel's bf16-operand / f32-accumulate math."""
    embed_w, w_ih, w_hh, b_ih, b_hh, w_out, b_out = params
    eprime = (embed_w @ w_ih.T + b_ih + b_hh).astype(jnp.bfloat16).astype(jnp.float32)
    x = jnp.take(eprime, sentences, axis=0)           # (B, T, H) f32 (bf16 values)
    B, T, H = x.shape
    whh_bf = w_hh.T.astype(jnp.bfloat16)
    wout_bf = w_out.T.astype(jnp.bfloat16)

    def step(h, x_t):
        pre = x_t + jnp.dot(h.astype(jnp.bfloat16), whh_bf,
                            preferred_element_type=jnp.float32)
        h_new = jnp.tanh(pre)
        return h_new, h_new

    h0 = jnp.zeros((B, H), jnp.float32)
    _, hs = jax.lax.scan(step, h0, jnp.transpose(x, (1, 0, 2)))   # (T, B, H)
    o = jnp.transpose(hs, (1, 0, 2)).astype(jnp.bfloat16)         # (B, T, H)
    return jnp.dot(o, wout_bf, preferred_element_type=jnp.float32) + b_out


if __name__ == "__main__":
    key = jax.random.PRNGKey(0)
    k_param, k_data = jax.random.split(key)

    B, T = 2, 8
    params = init_params(k_param)
    sentences = jax.random.randint(k_data, (B, T), 0, VOCAB, dtype=jnp.int32)

    out = jax.block_until_ready(rnn_forward(sentences, params))
    assert out.shape == (B, T, VOCAB)

    # Tight check against a reference with identical bf16/f32 mixed precision.
    ref_bf16 = rnn_forward_ref_bf16(sentences, params)
    assert jnp.allclose(out, ref_bf16, atol=5e-3, rtol=5e-3), "bf16-matched ref mismatch"

    # Looser fidelity check against the pure-f32 PyTorch-equivalent math
    # (bf16 MXU operands trade a small amount of precision for throughput).
    ref_f32 = rnn_forward_ref(sentences, params)
    assert jnp.allclose(out, ref_f32, atol=5e-2, rtol=5e-2), "f32 ref mismatch"

    print("KERNEL_OK")
</pallas_src>

<mosaic_0001>
module attributes {stable_mosaic.version = 11 : i64} {
  func.func @rnn_kernel(%arg0: i32, %arg1: memref<64x1xi32, #tpu.memory_space<vmem>>, %arg2: memref<32x256xbf16, #tpu.memory_space<vmem>>, %arg3: memref<256x256xbf16, #tpu.memory_space<vmem>>, %arg4: memref<256x32xbf16, #tpu.memory_space<vmem>>, %arg5: memref<1x32xf32, #tpu.memory_space<vmem>>, %arg6: memref<64x32xf32, #tpu.memory_space<vmem>>, %arg7: memref<64x256xf32, #tpu.memory_space<vmem>>, %arg8: memref<64x256xf32, #tpu.memory_space<vmem>>, %arg9: memref<8x256xf32, #tpu.memory_space<vmem>>) attributes {dimension_semantics = [#tpu.dimension_semantics<arbitrary>], iteration_bounds = array<i64: 1>, scalar_prefetch = 0 : i64, scratch_operands = 3 : i64, tpu.core_type = #tpu.core_type<tc>, window_params = [{transform_indices = @transform_0, window_bounds = array<i64: 64, 1>}, {pipeline_mode = #tpu.pipeline_mode<synchronous>, transform_indices = @transform_1, window_bounds = array<i64: 32, 256>}, {pipeline_mode = #tpu.pipeline_mode<synchronous>, transform_indices = @transform_2, window_bounds = array<i64: 256, 256>}, {pipeline_mode = #tpu.pipeline_mode<synchronous>, transform_indices = @transform_3, window_bounds = array<i64: 256, 32>}, {pipeline_mode = #tpu.pipeline_mode<synchronous>, transform_indices = @transform_4, window_bounds = array<i64: 1, 32>}, {transform_indices = @transform_5, window_bounds = array<i64: 64, 32>}]} {
    %c0_i32 = arith.constant 0 : i32
    %0 = arith.cmpi eq, %arg0, %c0_i32 : i32
    %1 = arith.extui %0 : i1 to i32
    %c0_i32_0 = arith.constant 0 : i32
    %2 = arith.cmpi ne, %1, %c0_i32_0 : i32
    scf.if %2 {
      %cst_68 = arith.constant 0.000000e+00 : f32
      %111 = vector.broadcast %cst_68 : f32 to vector<8x256xf32>
      %c0_69 = arith.constant 0 : index
      %c0_70 = arith.constant 0 : index
      %112 = vector.load %arg9[%c0_69, %c0_70] : memref<8x256xf32, #tpu.memory_space<vmem>>, vector<8x256xf32>
      tpu.vector_store %arg9[%c0_69, %c0_70], %111 {strides = array<i32>} : memref<8x256xf32, #tpu.memory_space<vmem>>, vector<8x256xf32>,
    } else {
    }
    %c0 = arith.constant 0 : index
    %c0_1 = arith.constant 0 : index
    %3 = vector.load %arg1[%c0, %c0_1] : memref<64x1xi32, #tpu.memory_space<vmem>>, vector<64x1xi32>
    %4 = tpu.iota {dimensions = array<i32: 1>} : vector<64x32xi32>
    %5 = vector.broadcast %3 : vector<64x1xi32> to vector<64x32xi32>
    %6 = arith.cmpi eq, %5, %4 : vector<64x32xi32>
    %7 = arith.extui %6 : vector<64x32xi1> to vector<64x32xi32>
    %8 = arith.sitofp %7 : vector<64x32xi32> to vector<64x32xf32>
    %9 = arith.truncf %8 : vector<64x32xf32> to vector<64x32xbf16>
    %c0_2 = arith.constant 0 : index
    %c0_3 = arith.constant 0 : index
    %10 = vector.load %arg2[%c0_2, %c0_3] : memref<32x256xbf16, #tpu.memory_space<vmem>>, vector<32x256xbf16>
    %cst = arith.constant dense<0.000000e+00> : vector<64x256xf32>
    %11 = tpu.matmul %9, %10, %cst {dimension_numbers = #tpu.dot_dimension_numbers<[1], [0], [0], [1], [0, 0, 1, 1], [], []>} : vector<64x32xbf16>, vector<32x256xbf16>, vector<64x256xf32> -> vector<64x256xf32>
    %c0_4 = arith.constant 0 : index
    %c0_5 = arith.constant 0 : index
    %12 = vector.load %arg7[%c0_4, %c0_5] : memref<64x256xf32, #tpu.memory_space<vmem>>, vector<64x256xf32>
    tpu.vector_store %arg7[%c0_4, %c0_5], %11 {strides = array<i32>} : memref<64x256xf32, #tpu.memory_space<vmem>>, vector<64x256xf32>,
    %c0_6 = arith.constant 0 : index
    %c0_7 = arith.constant 0 : index
    %13 = vector.load %arg9[%c0_6, %c0_7] : memref<8x256xf32, #tpu.memory_space<vmem>>, vector<8x256xf32>
    %c0_i32_8 = arith.constant 0 : i32
    %c8_i32 = arith.constant 8 : i32
    %14 = arith.muli %c0_i32_8, %c8_i32 : i32
    %15 = tpu.assume_multiple %14, 8 : i32
    %16 = arith.index_cast %15 : i32 to index
    %c0_9 = arith.constant 0 : index
    %17 = vector.load %arg7[%16, %c0_9] : memref<64x256xf32, #tpu.memory_space<vmem>>, vector<8x256xf32>
    %18 = arith.truncf %13 : vector<8x256xf32> to vector<8x256xbf16>
    %c0_10 = arith.constant 0 : index
    %c0_11 = arith.constant 0 : index
    %19 = vector.load %arg3[%c0_10, %c0_11] : memref<256x256xbf16, #tpu.memory_space<vmem>>, vector<256x256xbf16>
    %cst_12 = arith.constant dense<0.000000e+00> : vector<8x256xf32>
    %20 = tpu.matmul %18, %19, %cst_12 {dimension_numbers = #tpu.dot_dimension_numbers<[1], [0], [0], [1], [0, 0, 1, 1], [], []>} : vector<8x256xbf16>, vector<256x256xbf16>, vector<8x256xf32> -> vector<8x256xf32>
    %21 = arith.addf %17, %20 : vector<8x256xf32>
    %22 = math.tanh %21 : vector<8x256xf32>
    %23 = arith.index_cast %15 : i32 to index
    %c0_13 = arith.constant 0 : index
    %24 = vector.load %arg8[%23, %c0_13] : memref<64x256xf32, #tpu.memory_space<vmem>>, vector<8x256xf32>
    tpu.vector_store %arg8[%23, %c0_13], %22 {strides = array<i32>} : memref<64x256xf32, #tpu.memory_space<vmem>>, vector<8x256xf32>,
    %c1_i32 = arith.constant 1 : i32
    %c8_i32_14 = arith.constant 8 : i32
    %25 = arith.muli %c1_i32, %c8_i32_14 : i32
    %26 = tpu.assume_multiple %25, 8 : i32
    %27 = arith.index_cast %26 : i32 to index
    %c0_15 = arith.constant 0 : index
    %28 = vector.load %arg7[%27, %c0_15] : memref<64x256xf32, #tpu.memory_space<vmem>>, vector<8x256xf32>
    %29 = arith.truncf %22 : vector<8x256xf32> to vector<8x256xbf16>
    %c0_16 = arith.constant 0 : index
    %c0_17 = arith.constant 0 : index
    %30 = vector.load %arg3[%c0_16, %c0_17] : memref<256x256xbf16, #tpu.memory_space<vmem>>, vector<256x256xbf16>
    %cst_18 = arith.constant dense<0.000000e+00> : vector<8x256xf32>
    %31 = tpu.matmul %29, %30, %cst_18 {dimension_numbers = #tpu.dot_dimension_numbers<[1], [0], [0], [1], [0, 0, 1, 1], [], []>} : vector<8x256xbf16>, vector<256x256xbf16>, vector<8x256xf32> -> vector<8x256xf32>
    %32 = arith.addf %28, %31 : vector<8x256xf32>
    %33 = math.tanh %32 : vector<8x256xf32>
    %34 = arith.index_cast %26 : i32 to index
    %c0_19 = arith.constant 0 : index
    %35 = vector.load %arg8[%34, %c0_19] : memref<64x256xf32, #tpu.memory_space<vmem>>, vector<8x256xf32>
    tpu.vector_store %arg8[%34, %c0_19], %33 {strides = array<i32>} : memref<64x256xf32, #tpu.memory_space<vmem>>, vector<8x256xf32>,
    %c2_i32 = arith.constant 2 : i32
    %c8_i32_20 = arith.constant 8 : i32
    %36 = arith.muli %c2_i32, %c8_i32_20 : i32
    %37 = tpu.assume_multiple %36, 8 : i32
    %38 = arith.index_cast %37 : i32 to index
    %c0_21 = arith.constant 0 : index
    %39 = vector.load %arg7[%38, %c0_21] : memref<64x256xf32, #tpu.memory_space<vmem>>, vector<8x256xf32>
    %40 = arith.truncf %33 : vector<8x256xf32> to vector<8x256xbf16>
    %c0_22 = arith.constant 0 : index
    %c0_23 = arith.constant 0 : index
    %41 = vector.load %arg3[%c0_22, %c0_23] : memref<256x256xbf16, #tpu.memory_space<vmem>>, vector<256x256xbf16>
    %cst_24 = arith.constant dense<0.000000e+00> : vector<8x256xf32>
    %42 = tpu.matmul %40, %41, %cst_24 {dimension_numbers = #tpu.dot_dimension_numbers<[1], [0], [0], [1], [0, 0, 1, 1], [], []>} : vector<8x256xbf16>, vector<256x256xbf16>, vector<8x256xf32> -> vector<8x256xf32>
    %43 = arith.addf %39, %42 : vector<8x256xf32>
    %44 = math.tanh %43 : vector<8x256xf32>
    %45 = arith.index_cast %37 : i32 to index
    %c0_25 = arith.constant 0 : index
    %46 = vector.load %arg8[%45, %c0_25] : memref<64x256xf32, #tpu.memory_space<vmem>>, vector<8x256xf32>
    tpu.vector_store %arg8[%45, %c0_25], %44 {strides = array<i32>} : memref<64x256xf32, #tpu.memory_space<vmem>>, vector<8x256xf32>,
    %c3_i32 = arith.constant 3 : i32
    %c8_i32_26 = arith.constant 8 : i32
    %47 = arith.muli %c3_i32, %c8_i32_26 : i32
    %48 = tpu.assume_multiple %47, 8 : i32
    %49 = arith.index_cast %48 : i32 to index
    %c0_27 = arith.constant 0 : index
    %50 = vector.load %arg7[%49, %c0_27] : memref<64x256xf32, #tpu.memory_space<vmem>>, vector<8x256xf32>
    %51 = arith.truncf %44 : vector<8x256xf32> to vector<8x256xbf16>
    %c0_28 = arith.constant 0 : index
    %c0_29 = arith.constant 0 : index
    %52 = vector.load %arg3[%c0_28, %c0_29] : memref<256x256xbf16, #tpu.memory_space<vmem>>, vector<256x256xbf16>
    %cst_30 = arith.constant dense<0.000000e+00> : vector<8x256xf32>
    %53 = tpu.matmul %51, %52, %cst_30 {dimension_numbers = #tpu.dot_dimension_numbers<[1], [0], [0], [1], [0, 0, 1, 1], [], []>} : vector<8x256xbf16>, vector<256x256xbf16>, vector<8x256xf32> -> vector<8x256xf32>
    %54 = arith.addf %50, %53 : vector<8x256xf32>
    %55 = math.tanh %54 : vector<8x256xf32>
    %56 = arith.index_cast %48 : i32 to index
    %c0_31 = arith.constant 0 : index
    %57 = vector.load %arg8[%56, %c0_31] : memref<64x256xf32, #tpu.memory_space<vmem>>, vector<8x256xf32>
    tpu.vector_store %arg8[%56, %c0_31], %55 {strides = array<i32>} : memref<64x256xf32, #tpu.memory_space<vmem>>, vector<8x256xf32>,
    %c4_i32 = arith.constant 4 : i32
    %c8_i32_32 = arith.constant 8 : i32
    %58 = arith.muli %c4_i32, %c8_i32_32 : i32
    %59 = tpu.assume_multiple %58, 8 : i32
    %60 = arith.index_cast %59 : i32 to index
    %c0_33 = arith.constant 0 : index
    %61 = vector.load %arg7[%60, %c0_33] : memref<64x256xf32, #tpu.memory_space<vmem>>, vector<8x256xf32>
    %62 = arith.truncf %55 : vector<8x256xf32> to vector<8x256xbf16>
    %c0_34 = arith.constant 0 : index
    %c0_35 = arith.constant 0 : index
    %63 = vector.load %arg3[%c0_34, %c0_35] : memref<256x256xbf16, #tpu.memory_space<vmem>>, vector<256x256xbf16>
    %cst_36 = arith.constant dense<0.000000e+00> : vector<8x256xf32>
    %64 = tpu.matmul %62, %63, %cst_36 {dimension_numbers = #tpu.dot_dimension_numbers<[1], [0], [0], [1], [0, 0, 1, 1], [], []>} : vector<8x256xbf16>, vector<256x256xbf16>, vector<8x256xf32> -> vector<8x256xf32>
    %65 = arith.addf %61, %64 : vector<8x256xf32>
    %66 = math.tanh %65 : vector<8x256xf32>
    %67 = arith.index_cast %59 : i32 to index
    %c0_37 = arith.constant 0 : index
    %68 = vector.load %arg8[%67, %c0_37] : memref<64x256xf32, #tpu.memory_space<vmem>>, vector<8x256xf32>
    tpu.vector_store %arg8[%67, %c0_37], %66 {strides = array<i32>} : memref<64x256xf32, #tpu.memory_space<vmem>>, vector<8x256xf32>,
    %c5_i32 = arith.constant 5 : i32
    %c8_i32_38 = arith.constant 8 : i32
    %69 = arith.muli %c5_i32, %c8_i32_38 : i32
    %70 = tpu.assume_multiple %69, 8 : i32
    %71 = arith.index_cast %70 : i32 to index
    %c0_39 = arith.constant 0 : index
    %72 = vector.load %arg7[%71, %c0_39] : memref<64x256xf32, #tpu.memory_space<vmem>>, vector<8x256xf32>
    %73 = arith.truncf %66 : vector<8x256xf32> to vector<8x256xbf16>
    %c0_40 = arith.constant 0 : index
    %c0_41 = arith.constant 0 : index
    %74 = vector.load %arg3[%c0_40, %c0_41] : memref<256x256xbf16, #tpu.memory_space<vmem>>, vector<256x256xbf16>
    %cst_42 = arith.constant dense<0.000000e+00> : vector<8x256xf32>
    %75 = tpu.matmul %73, %74, %cst_42 {dimension_numbers = #tpu.dot_dimension_numbers<[1], [0], [0], [1], [0, 0, 1, 1], [], []>} : vector<8x256xbf16>, vector<256x256xbf16>, vector<8x256xf32> -> vector<8x256xf32>
    %76 = arith.addf %72, %75 : vector<8x256xf32>
    %77 = math.tanh %76 : vector<8x256xf32>
    %78 = arith.index_cast %70 : i32 to index
    %c0_43 = arith.constant 0 : index
    %79 = vector.load %arg8[%78, %c0_43] : memref<64x256xf32, #tpu.memory_space<vmem>>, vector<8x256xf32>
    tpu.vector_store %arg8[%78, %c0_43], %77 {strides = array<i32>} : memref<64x256xf32, #tpu.memory_space<vmem>>, vector<8x256xf32>,
    %c6_i32 = arith.constant 6 : i32
    %c8_i32_44 = arith.constant 8 : i32
    %80 = arith.muli %c6_i32, %c8_i32_44 : i32
    %81 = tpu.assume_multiple %80, 8 : i32
    %82 = arith.index_cast %81 : i32 to index
    %c0_45 = arith.constant 0 : index
    %83 = vector.load %arg7[%82, %c0_45] : memref<64x256xf32, #tpu.memory_space<vmem>>, vector<8x256xf32>
    %84 = arith.truncf %77 : vector<8x256xf32> to vector<8x256xbf16>
    %c0_46 = arith.constant 0 : index
    %c0_47 = arith.constant 0 : index
    %85 = vector.load %arg3[%c0_46, %c0_47] : memref<256x256xbf16, #tpu.memory_space<vmem>>, vector<256x256xbf16>
    %cst_48 = arith.constant dense<0.000000e+00> : vector<8x256xf32>
    %86 = tpu.matmul %84, %85, %cst_48 {dimension_numbers = #tpu.dot_dimension_numbers<[1], [0], [0], [1], [0, 0, 1, 1], [], []>} : vector<8x256xbf16>, vector<256x256xbf16>, vector<8x256xf32> -> vector<8x256xf32>
    %87 = arith.addf %83, %86 : vector<8x256xf32>
    %88 = math.tanh %87 : vector<8x256xf32>
    %89 = arith.index_cast %81 : i32 to index
    %c0_49 = arith.constant 0 : index
    %90 = vector.load %arg8[%89, %c0_49] : memref<64x256xf32, #tpu.memory_space<vmem>>, vector<8x256xf32>
    tpu.vector_store %arg8[%89, %c0_49], %88 {strides = array<i32>} : memref<64x256xf32, #tpu.memory_space<vmem>>, vector<8x256xf32>,
    %c7_i32 = arith.constant 7 : i32
    %c8_i32_50 = arith.constant 8 : i32
    %91 = arith.muli %c7_i32, %c8_i32_50 : i32
    %92 = tpu.assume_multiple %91, 8 : i32
    %93 = arith.index_cast %92 : i32 to index
    %c0_51 = arith.constant 0 : index
    %94 = vector.load %arg7[%93, %c0_51] : memref<64x256xf32, #tpu.memory_space<vmem>>, vector<8x256xf32>
    %95 = arith.truncf %88 : vector<8x256xf32> to vector<8x256xbf16>
    %c0_52 = arith.constant 0 : index
    %c0_53 = arith.constant 0 : index
    %96 = vector.load %arg3[%c0_52, %c0_53] : memref<256x256xbf16, #tpu.memory_space<vmem>>, vector<256x256xbf16>
    %cst_54 = arith.constant dense<0.000000e+00> : vector<8x256xf32>
    %97 = tpu.matmul %95, %96, %cst_54 {dimension_numbers = #tpu.dot_dimension_numbers<[1], [0], [0], [1], [0, 0, 1, 1], [], []>} : vector<8x256xbf16>, vector<256x256xbf16>, vector<8x256xf32> -> vector<8x256xf32>
    %98 = arith.addf %94, %97 : vector<8x256xf32>
    %99 = math.tanh %98 : vector<8x256xf32>
    %100 = arith.index_cast %92 : i32 to index
    %c0_55 = arith.constant 0 : index
    %101 = vector.load %arg8[%100, %c0_55] : memref<64x256xf32, #tpu.memory_space<vmem>>, vector<8x256xf32>
    tpu.vector_store %arg8[%100, %c0_55], %99 {strides = array<i32>} : memref<64x256xf32, #tpu.memory_space<vmem>>, vector<8x256xf32>,
    %c8_i32_56 = arith.constant 8 : i32
    %c0_57 = arith.constant 0 : index
    %c0_58 = arith.constant 0 : index
    %102 = vector.load %arg9[%c0_57, %c0_58] : memref<8x256xf32, #tpu.memory_space<vmem>>, vector<8x256xf32>
    tpu.vector_store %arg9[%c0_57, %c0_58], %99 {strides = array<i32>} : memref<8x256xf32, #tpu.memory_space<vmem>>, vector<8x256xf32>,
    %c0_59 = arith.constant 0 : index
    %c0_60 = arith.constant 0 : index
    %103 = vector.load %arg8[%c0_59, %c0_60] : memref<64x256xf32, #tpu.memory_space<vmem>>, vector<64x256xf32>
    %104 = arith.truncf %103 : vector<64x256xf32> to vector<64x256xbf16>
    %c0_61 = arith.constant 0 : index
    %c0_62 = arith.constant 0 : index
    %105 = vector.load %arg4[%c0_61, %c0_62] : memref<256x32xbf16, #tpu.memory_space<vmem>>, vector<256x32xbf16>
    %cst_63 = arith.constant dense<0.000000e+00> : vector<64x32xf32>
    %106 = tpu.matmul %104, %105, %cst_63 {dimension_numbers = #tpu.dot_dimension_numbers<[1], [0], [0], [1], [0, 0, 1, 1], [], []>} : vector<64x256xbf16>, vector<256x32xbf16>, vector<64x32xf32> -> vector<64x32xf32>
    %c0_64 = arith.constant 0 : index
    %c0_65 = arith.constant 0 : index
    %107 = vector.load %arg5[%c0_64, %c0_65] : memref<1x32xf32, #tpu.memory_space<vmem>>, vector<1x32xf32>
    %108 = vector.broadcast %107 : vector<1x32xf32> to vector<64x32xf32>
    %109 = arith.addf %106, %108 : vector<64x32xf32>
    %c0_66 = arith.constant 0 : index
    %c0_67 = arith.constant 0 : index
    %110 = vector.load %arg6[%c0_66, %c0_67] : memref<64x32xf32, #tpu.memory_space<vmem>>, vector<64x32xf32>
    tpu.vector_store %arg6[%c0_66, %c0_67], %109 {strides = array<i32>} : memref<64x32xf32, #tpu.memory_space<vmem>>, vector<64x32xf32>,
    return
  }
  func.func @transform_0(%arg0: i32) -> (i32, i32) {
    %c0_i32 = arith.constant 0 : i32
    %c0_i32_0 = arith.constant 0 : i32
    return %arg0, %c0_i32 : i32, i32
  }
  func.func @transform_1(%arg0: i32) -> (i32, i32) {
    %c0_i32 = arith.constant 0 : i32
    %c0_i32_0 = arith.constant 0 : i32
    %c0_i32_1 = arith.constant 0 : i32
    return %c0_i32, %c0_i32_0 : i32, i32
  }
  func.func @transform_2(%arg0: i32) -> (i32, i32) {
    %c0_i32 = arith.constant 0 : i32
    %c0_i32_0 = arith.constant 0 : i32
    %c0_i32_1 = arith.constant 0 : i32
    return %c0_i32, %c0_i32_0 : i32, i32
  }
  func.func @transform_3(%arg0: i32) -> (i32, i32) {
    %c0_i32 = arith.constant 0 : i32
    %c0_i32_0 = arith.constant 0 : i32
    %c0_i32_1 = arith.constant 0 : i32
    return %c0_i32, %c0_i32_0 : i32, i32
  }
  func.func @transform_4(%arg0: i32) -> (i32, i32) {
    %c0_i32 = arith.constant 0 : i32
    %c0_i32_0 = arith.constant 0 : i32
    %c0_i32_1 = arith.constant 0 : i32
    return %c0_i32, %c0_i32_0 : i32, i32
  }
  func.func @transform_5(%arg0: i32) -> (i32, i32) {
    %c0_i32 = arith.constant 0 : i32
    %c0_i32_0 = arith.constant 0 : i32
    return %arg0, %c0_i32 : i32, i32
  }
}

</mosaic_0001>

<llo_original>
// kernel: rnn_forward.1
$region0: #{rnn_forward.1}
  #allocation0 [shape = 'u32[]', space=smem, size = 0x4, offset = 0x4, fixed_abs, tag = 'smem constant byte address 0x4 - core index']
  #allocation1 [shape = 'u32[72,128]{1,0:T(1,128)}', space=vmem, size = 0x9000, scoped, tag = 'internal scratch']
  #allocation2 [shape = 'f32[64,256]{1,0:T(8,128)}', space=vmem, size = 0x10000, scoped, tag = 'scratch operand']
  #allocation3 [shape = 'f32[64,256]{1,0:T(8,128)}', space=vmem, size = 0x10000, scoped, tag = 'scratch operand']
  #allocation4 [shape = 'f32[8,256]{1,0:T(8,128)}', space=vmem, size = 0x2000, scoped, tag = 'scratch operand']
  %s0 = inlined_call_operand.vmem [shape: s32[64,1], index: 0, kind: input, shape index: {}]
  %s1 = inlined_call_operand.vmem [shape: bf16[32,256], index: 1, kind: input, shape index: {}]
  %s2 = inlined_call_operand.vmem [shape: bf16[256,256], index: 2, kind: input, shape index: {}]
  %s3 = inlined_call_operand.vmem [shape: bf16[256,32], index: 3, kind: input, shape index: {}]
  %s4 = inlined_call_operand.vmem [shape: f32[1,32], index: 4, kind: input, shape index: {}]
  %s5 = inlined_call_operand.vmem [shape: f32[64,32], index: 5, kind: output, shape index: {}]
  %s6 = sld [smem:[#allocation0]]
  $region34: #{rnn_forward.1} parent=0
    _
  %s8 = ssub.s32 1, %s6
  %s9 = scalar_select 0, %s8, %s6
  // Predicated region
  $region2: #{rnn_forward.1} parent=0 // pred_check
    _
  $region3: #{rnn_forward.1} parent=0 // pred_check_branch
    %11 = sbr.rel (0) target = $region5
  $region4: #{rnn_forward.1} parent=0 // pred_region
    _
  $region5: #{rnn_forward.1} parent=0 // pred_fallthru
    _
  // Predicated region
  $region6: #{rnn_forward.1} parent=0 // pred_check
    _
  $region7: #{rnn_forward.1} parent=0 // pred_check_branch
    %13 = sbr.rel (0) target = $region9
  $region8: #{rnn_forward.1} parent=0 // pred_region
    _
  $region9: #{rnn_forward.1} parent=0 // pred_fallthru
    _
  // Predicated region
  $region10: #{rnn_forward.1} parent=0 // pred_check
    _
  $region11: #{rnn_forward.1} parent=0 // pred_check_branch
    %15 = sbr.rel (0) target = $region13
  $region12: #{rnn_forward.1} parent=0 // pred_region
    _
  $region13: #{rnn_forward.1} parent=0 // pred_fallthru
    _
  // Predicated region
  $region14: #{rnn_forward.1} parent=0 // pred_check
    _
  $region15: #{rnn_forward.1} parent=0 // pred_check_branch
    %17 = sbr.rel (0) target = $region17
  $region16: #{rnn_forward.1} parent=0 // pred_region
    _
  $region17: #{rnn_forward.1} parent=0 // pred_fallthru
    _
  // Predicated region
  $region18: #{rnn_forward.1} parent=0 // pred_check
    _
  $region19: #{rnn_forward.1} parent=0 // pred_check_branch
    %19 = sbr.rel (0) target = $region21
  $region20: #{rnn_forward.1} parent=0 // pred_region
    _
  $region21: #{rnn_forward.1} parent=0 // pred_fallthru
    _
  %p21 = scmp.eq.s32.totalorder 0, 0
  // Predicated region
  $region22: #{rnn_forward.1} parent=0 // pred_check
    %p22 = pneg %p21
  $region23: #{rnn_forward.1} parent=0 // pred_check_branch
    %24 = sbr.rel (%p22) target = $region25
  $region24: #{rnn_forward.1} parent=0 // pred_region
    %25 = vst [vmem:[#allocation4] sm:$0xff] 0.0
    %26 = vst [vmem:[#allocation4 + $0x8] sm:$0xff] 0.0
  $region25: #{rnn_forward.1} parent=0 // pred_fallthru
    _
  %v27 = vld [vmem:[%s0] sm:$0xff]
  %v28 = vld [vmem:[%s0 + $0x8] sm:$0xff]
  %v29 = vld [vmem:[%s0 + $0x10] sm:$0xff]
  %v30 = vld [vmem:[%s0 + $0x18] sm:$0xff]
  %v31 = vld [vmem:[%s0 + $0x20] sm:$0xff]
  %v32 = vld [vmem:[%s0 + $0x28] sm:$0xff]
  %v33 = vld [vmem:[%s0 + $0x30] sm:$0xff]
  %v34 = vld [vmem:[%s0 + $0x38] sm:$0xff]
  %v35 = vlaneseq
  %v36 = vand.u32 %v35, 127
  %37 = vset.pattern.permute.xlu0 0
  %38 = vperm.xlu0 %37, %v27
  %v39 = vpop.permute.xlu0 %38
  %40 = vset.pattern.permute.xlu0 0
  %41 = vperm.xlu0 %40, %v28
  %v42 = vpop.permute.xlu0 %41
  %43 = vset.pattern.permute.xlu0 0
  %44 = vperm.xlu0 %43, %v29
  %v45 = vpop.permute.xlu0 %44
  %46 = vset.pattern.permute.xlu0 0
  %47 = vperm.xlu0 %46, %v30
  %v48 = vpop.permute.xlu0 %47
  %49 = vset.pattern.permute.xlu0 0
  %50 = vperm.xlu0 %49, %v31
  %v51 = vpop.permute.xlu0 %50
  %52 = vset.pattern.permute.xlu0 0
  %53 = vperm.xlu0 %52, %v32
  %v54 = vpop.permute.xlu0 %53
  %55 = vset.pattern.permute.xlu0 0
  %56 = vperm.xlu0 %55, %v33
  %v57 = vpop.permute.xlu0 %56
  %58 = vset.pattern.permute.xlu0 0
  %59 = vperm.xlu0 %58, %v34
  %v60 = vpop.permute.xlu0 %59
  %vm61 = vcmp.eq.s32.totalorder %v39, %v36
  %vm62 = vcmp.eq.s32.totalorder %v42, %v36
  %vm63 = vcmp.eq.s32.totalorder %v45, %v36
  %vm64 = vcmp.eq.s32.totalorder %v48, %v36
  %vm65 = vcmp.eq.s32.totalorder %v51, %v36
  %vm66 = vcmp.eq.s32.totalorder %v54, %v36
  %vm67 = vcmp.eq.s32.totalorder %v57, %v36
  %vm68 = vcmp.eq.s32.totalorder %v60, %v36
  %v69 = vsel %vm61, 1, 0
  %v70 = vsel %vm62, 1, 0
  %v71 = vsel %vm63, 1, 0
  %v72 = vsel %vm64, 1, 0
  %v73 = vsel %vm65, 1, 0
  %v74 = vsel %vm66, 1, 0
  %v75 = vsel %vm67, 1, 0
  %v76 = vsel %vm68, 1, 0
  %v77 = vcvt.s32.f32 %v69
  %v78 = vcvt.s32.f32 %v70
  %v79 = vcvt.s32.f32 %v71
  %v80 = vcvt.s32.f32 %v72
  %v81 = vcvt.s32.f32 %v73
  %v82 = vcvt.s32.f32 %v74
  %v83 = vcvt.s32.f32 %v75
  %v84 = vcvt.s32.f32 %v76
  %v85 = vpack.c.bf16 %v78, %v77
  %v86 = vpack.c.bf16 %v80, %v79
  %v87 = vpack.c.bf16 %v82, %v81
  %v88 = vpack.c.bf16 %v84, %v83
  %v89 = vld [vmem:[%s1] sm:$0xff]
  %v90 = vld [vmem:[%s1 + $0x8] sm:$0xff]
  %v91 = vld [vmem:[%s1 + $0x10] sm:$0xff]
  %v92 = vld [vmem:[%s1 + $0x18] sm:$0xff]
  %v97 = vunpack.c.l.b16 %v89
  %v98 = vunpack.c.h.b16 %v89
  %v99 = vunpack.c.l.b16 %v90
  %v100 = vunpack.c.h.b16 %v90
  %v101 = vunpack.c.l.b16 %v91
  %v102 = vunpack.c.h.b16 %v91
  %v103 = vunpack.c.l.b16 %v92
  %v104 = vunpack.c.h.b16 %v92
  %v105 = vpack.c.b16 %v99, %v97
  %v106 = vpack.c.b16 %v100, %v98
  %v107 = vpack.c.b16 %v103, %v101
  %v108 = vpack.c.b16 %v104, %v102
  %vm113 = vcmask 261120
  %v115 = vsel %vm113, %v85, 0
  %v118 = vsel %vm113, %v86, 0
  %v121 = vsel %vm113, %v87, 0
  %v124 = vsel %vm113, %v88, 0
  %126 = vmatpush.bf16.msra.mxu0 0
  %127 = vmatpush.bf16.msra.mxu0 0
  %128 = vmatpush.bf16.msra.mxu0 0
  %129 = vmatpush.bf16.msra.mxu0 0
  %130 = vmatpush.bf16.msra.mxu0 0
  %131 = vmatpush.bf16.msra.mxu0 0
  %132 = vmatpush.bf16.msra.mxu0 %v107
  %133 = vmatpush.bf16.msra.mxu0 %v105
  %134 = vmatmul.bf16.gmra.mxu0 %v115
  %v135 = vpop.f32.mrf.mxu0
  %v136 = vadd.f32 0.0, %v135
  %v137 = vpop.f32.mrf.mxu0
  %v138 = vadd.f32 0.0, %v137
  %139 = vmatmul.bf16.gmra.mxu0 %v118
  %v140 = vpop.f32.mrf.mxu0
  %v141 = vadd.f32 0.0, %v140
  %v142 = vpop.f32.mrf.mxu0
  %v143 = vadd.f32 0.0, %v142
  %144 = vmatmul.bf16.gmra.mxu0 %v121
  %v145 = vpop.f32.mrf.mxu0
  %v146 = vadd.f32 0.0, %v145
  %v147 = vpop.f32.mrf.mxu0
  %v148 = vadd.f32 0.0, %v147
  %149 = vmatmul.bf16.gmra.mxu0 %v124
  %v150 = vpop.f32.mrf.mxu0
  %v151 = vadd.f32 0.0, %v150
  %v152 = vpop.f32.mrf.mxu0
  %v153 = vadd.f32 0.0, %v152
  %154 = vdwg.mxu0
  %155 = vmatpush.bf16.msra.mxu0 0
  %156 = vmatpush.bf16.msra.mxu0 0
  %157 = vmatpush.bf16.msra.mxu0 0
  %158 = vmatpush.bf16.msra.mxu0 0
  %159 = vmatpush.bf16.msra.mxu0 0
  %160 = vmatpush.bf16.msra.mxu0 0
  %161 = vmatpush.bf16.msra.mxu0 %v108
  %162 = vmatpush.bf16.msra.mxu0 %v106
  %163 = vmatmul.bf16.gmra.mxu0 %v115
  %v164 = vpop.f32.mrf.mxu0
  %v165 = vadd.f32 0.0, %v164
  %v166 = vpop.f32.mrf.mxu0
  %v167 = vadd.f32 0.0, %v166
  %168 = vmatmul.bf16.gmra.mxu0 %v118
  %v169 = vpop.f32.mrf.mxu0
  %v170 = vadd.f32 0.0, %v169
  %v171 = vpop.f32.mrf.mxu0
  %v172 = vadd.f32 0.0, %v171
  %173 = vmatmul.bf16.gmra.mxu0 %v121
  %v174 = vpop.f32.mrf.mxu0
  %v175 = vadd.f32 0.0, %v174
  %v176 = vpop.f32.mrf.mxu0
  %v177 = vadd.f32 0.0, %v176
  %178 = vmatmul.bf16.gmra.mxu0 %v124
  %v179 = vpop.f32.mrf.mxu0
  %v180 = vadd.f32 0.0, %v179
  %v181 = vpop.f32.mrf.mxu0
  %v182 = vadd.f32 0.0, %v181
  %183 = vdwg.mxu0
  %184 = vst [vmem:[#allocation2] sm:$0xff] %v136
  %185 = vst [vmem:[#allocation2 + $0x8] sm:$0xff] %v165
  %186 = vst [vmem:[#allocation2 + $0x10] sm:$0xff] %v138
  %187 = vst [vmem:[#allocation2 + $0x18] sm:$0xff] %v167
  %188 = vst [vmem:[#allocation2 + $0x20] sm:$0xff] %v141
  %189 = vst [vmem:[#allocation2 + $0x28] sm:$0xff] %v170
  %190 = vst [vmem:[#allocation2 + $0x30] sm:$0xff] %v143
  %191 = vst [vmem:[#allocation2 + $0x38] sm:$0xff] %v172
  %192 = vst [vmem:[#allocation2 + $0x40] sm:$0xff] %v146
  %193 = vst [vmem:[#allocation2 + $0x48] sm:$0xff] %v175
  %194 = vst [vmem:[#allocation2 + $0x50] sm:$0xff] %v148
  %195 = vst [vmem:[#allocation2 + $0x58] sm:$0xff] %v177
  %196 = vst [vmem:[#allocation2 + $0x60] sm:$0xff] %v151
  %197 = vst [vmem:[#allocation2 + $0x68] sm:$0xff] %v180
  %198 = vst [vmem:[#allocation2 + $0x70] sm:$0xff] %v153
  %199 = vst [vmem:[#allocation2 + $0x78] sm:$0xff] %v182
  %v200 = vld [vmem:[#allocation4] sm:$0xff]
  %v201 = vld [vmem:[#allocation4 + $0x8] sm:$0xff]
  %s202 = smul.u32 0, 2
  %s203 = smul.addr %s202, 8
  %s204 = scalar_lea.vmem [#allocation2], %s203
  %v205 = vld [vmem:[%s204] sm:$0xff]
  %v206 = vld [vmem:[%s204 + $0x8] sm:$0xff]
  %v207 = vpack.c.bf16 %v200, %v200
  %v208 = vpack.c.bf16 %v201, %v201
  %v209 = vld [vmem:[%s2] sm:$0xff]
  %v210 = vld [vmem:[%s2 + $0x8] sm:$0xff]
  %v211 = vld [vmem:[%s2 + $0x10] sm:$0xff]
  %v212 = vld [vmem:[%s2 + $0x18] sm:$0xff]
  %v213 = vld [vmem:[%s2 + $0x20] sm:$0xff]
  %v214 = vld [vmem:[%s2 + $0x28] sm:$0xff]
  %v215 = vld [vmem:[%s2 + $0x30] sm:$0xff]
  %v216 = vld [vmem:[%s2 + $0x38] sm:$0xff]
  %v217 = vld [vmem:[%s2 + $0x40] sm:$0xff]
  %v218 = vld [vmem:[%s2 + $0x48] sm:$0xff]
  %v219 = vld [vmem:[%s2 + $0x50] sm:$0xff]
  %v220 = vld [vmem:[%s2 + $0x58] sm:$0xff]
  %v221 = vld [vmem:[%s2 + $0x60] sm:$0xff]
  %v222 = vld [vmem:[%s2 + $0x68] sm:$0xff]
  %v223 = vld [vmem:[%s2 + $0x70] sm:$0xff]
  %v224 = vld [vmem:[%s2 + $0x78] sm:$0xff]
  %v225 = vld [vmem:[%s2 + $0x80] sm:$0xff]
  %v226 = vld [vmem:[%s2 + $0x88] sm:$0xff]
  %v227 = vld [vmem:[%s2 + $0x90] sm:$0xff]
  %v228 = vld [vmem:[%s2 + $0x98] sm:$0xff]
  %v229 = vld [vmem:[%s2 + $0xa0] sm:$0xff]
  %v230 = vld [vmem:[%s2 + $0xa8] sm:$0xff]
  %v231 = vld [vmem:[%s2 + $0xb0] sm:$0xff]
  %v232 = vld [vmem:[%s2 + $0xb8] sm:$0xff]
  %v233 = vld [vmem:[%s2 + $0xc0] sm:$0xff]
  %v234 = vld [vmem:[%s2 + $0xc8] sm:$0xff]
  %v235 = vld [vmem:[%s2 + $0xd0] sm:$0xff]
  %v236 = vld [vmem:[%s2 + $0xd8] sm:$0xff]
  %v237 = vld [vmem:[%s2 + $0xe0] sm:$0xff]
  %v238 = vld [vmem:[%s2 + $0xe8] sm:$0xff]
  %v239 = vld [vmem:[%s2 + $0xf0] sm:$0xff]
  %v240 = vld [vmem:[%s2 + $0xf8] sm:$0xff]
  %v273 = vunpack.c.l.b16 %v209
  %v274 = vunpack.c.h.b16 %v209
  %v275 = vunpack.c.l.b16 %v210
  %v276 = vunpack.c.h.b16 %v210
  %v277 = vunpack.c.l.b16 %v211
  %v278 = vunpack.c.h.b16 %v211
  %v279 = vunpack.c.l.b16 %v212
  %v280 = vunpack.c.h.b16 %v212
  %v281 = vunpack.c.l.b16 %v213
  %v282 = vunpack.c.h.b16 %v213
  %v283 = vunpack.c.l.b16 %v214
  %v284 = vunpack.c.h.b16 %v214
  %v285 = vunpack.c.l.b16 %v215
  %v286 = vunpack.c.h.b16 %v215
  %v287 = vunpack.c.l.b16 %v216
  %v288 = vunpack.c.h.b16 %v216
  %v289 = vunpack.c.l.b16 %v217
  %v290 = vunpack.c.h.b16 %v217
  %v291 = vunpack.c.l.b16 %v218
  %v292 = vunpack.c.h.b16 %v218
  %v293 = vunpack.c.l.b16 %v219
  %v294 = vunpack.c.h.b16 %v219
  %v295 = vunpack.c.l.b16 %v220
  %v296 = vunpack.c.h.b16 %v220
  %v297 = vunpack.c.l.b16 %v221
  %v298 = vunpack.c.h.b16 %v221
  %v299 = vunpack.c.l.b16 %v222
  %v300 = vunpack.c.h.b16 %v222
  %v301 = vunpack.c.l.b16 %v223
  %v302 = vunpack.c.h.b16 %v223
  %v303 = vunpack.c.l.b16 %v224
  %v304 = vunpack.c.h.b16 %v224
  %v305 = vunpack.c.l.b16 %v225
  %v306 = vunpack.c.h.b16 %v225
  %v307 = vunpack.c.l.b16 %v226
  %v308 = vunpack.c.h.b16 %v226
  %v309 = vunpack.c.l.b16 %v227
  %v310 = vunpack.c.h.b16 %v227
  %v311 = vunpack.c.l.b16 %v228
  %v312 = vunpack.c.h.b16 %v228
  %v313 = vunpack.c.l.b16 %v229
  %v314 = vunpack.c.h.b16 %v229
  %v315 = vunpack.c.l.b16 %v230
  %v316 = vunpack.c.h.b16 %v230
  %v317 = vunpack.c.l.b16 %v231
  %v318 = vunpack.c.h.b16 %v231
  %v319 = vunpack.c.l.b16 %v232
  %v320 = vunpack.c.h.b16 %v232
  %v321 = vunpack.c.l.b16 %v233
  %v322 = vunpack.c.h.b16 %v233
  %v323 = vunpack.c.l.b16 %v234
  %v324 = vunpack.c.h.b16 %v234
  %v325 = vunpack.c.l.b16 %v235
  %v326 = vunpack.c.h.b16 %v235
  %v327 = vunpack.c.l.b16 %v236
  %v328 = vunpack.c.h.b16 %v236
  %v329 = vunpack.c.l.b16 %v237
  %v330 = vunpack.c.h.b16 %v237
  %v331 = vunpack.c.l.b16 %v238
  %v332 = vunpack.c.h.b16 %v238
  %v333 = vunpack.c.l.b16 %v239
  %v334 = vunpack.c.h.b16 %v239
  %v335 = vunpack.c.l.b16 %v240
  %v336 = vunpack.c.h.b16 %v240
  %v337 = vpack.c.b16 %v275, %v273
  %v338 = vpack.c.b16 %v276, %v274
  %v339 = vpack.c.b16 %v279, %v277
  %v340 = vpack.c.b16 %v280, %v278
  %v341 = vpack.c.b16 %v283, %v281
  %v342 = vpack.c.b16 %v284, %v282
  %v343 = vpack.c.b16 %v287, %v285
  %v344 = vpack.c.b16 %v288, %v286
  %v345 = vpack.c.b16 %v291, %v289
  %v346 = vpack.c.b16 %v292, %v290
  %v347 = vpack.c.b16 %v295, %v293
  %v348 = vpack.c.b16 %v296, %v294
  %v349 = vpack.c.b16 %v299, %v297
  %v350 = vpack.c.b16 %v300, %v298
  %v351 = vpack.c.b16 %v303, %v301
  %v352 = vpack.c.b16 %v304, %v302
  %v353 = vpack.c.b16 %v307, %v305
  %v354 = vpack.c.b16 %v308, %v306
  %v355 = vpack.c.b16 %v311, %v309
  %v356 = vpack.c.b16 %v312, %v310
  %v357 = vpack.c.b16 %v315, %v313
  %v358 = vpack.c.b16 %v316, %v314
  %v359 = vpack.c.b16 %v319, %v317
  %v360 = vpack.c.b16 %v320, %v318
  %v361 = vpack.c.b16 %v323, %v321
  %v362 = vpack.c.b16 %v324, %v322
  %v363 = vpack.c.b16 %v327, %v325
  %v364 = vpack.c.b16 %v328, %v326
  %v365 = vpack.c.b16 %v331, %v329
  %v366 = vpack.c.b16 %v332, %v330
  %v367 = vpack.c.b16 %v335, %v333
  %v368 = vpack.c.b16 %v336, %v334
  %401 = vmatpush.bf16.msra.mxu0 %v351
  %402 = vmatpush.bf16.msra.mxu0 %v349
  %403 = vmatpush.bf16.msra.mxu0 %v347
  %404 = vmatpush.bf16.msra.mxu0 %v345
  %405 = vmatpush.bf16.msra.mxu0 %v343
  %406 = vmatpush.bf16.msra.mxu0 %v341
  %407 = vmatpush.bf16.msra.mxu0 %v339
  %408 = vmatpush.bf16.msra.mxu0 %v337
  %409 = vmatmul.bf16.gmra.mxu0 %v207
  %v410 = vpop.f32.mrf.mxu0
  %v411 = vadd.f32 0.0, %v410
  %v412 = vpop.f32.mrf.mxu0
  %413 = vdwg.mxu0
  %414 = vmatpush.bf16.msra.mxu0 %v367
  %415 = vmatpush.bf16.msra.mxu0 %v365
  %416 = vmatpush.bf16.msra.mxu0 %v363
  %417 = vmatpush.bf16.msra.mxu0 %v361
  %418 = vmatpush.bf16.msra.mxu0 %v359
  %419 = vmatpush.bf16.msra.mxu0 %v357
  %420 = vmatpush.bf16.msra.mxu0 %v355
  %421 = vmatpush.bf16.msra.mxu0 %v353
  %422 = vmatmul.bf16.gmra.mxu0 %v208
  %v423 = vpop.f32.mrf.mxu0
  %v424 = vadd.f32 %v411, %v423
  %v425 = vpop.f32.mrf.mxu0
  %426 = vdwg.mxu0
  %427 = vmatpush.bf16.msra.mxu0 %v352
  %428 = vmatpush.bf16.msra.mxu0 %v350
  %429 = vmatpush.bf16.msra.mxu0 %v348
  %430 = vmatpush.bf16.msra.mxu0 %v346
  %431 = vmatpush.bf16.msra.mxu0 %v344
  %432 = vmatpush.bf16.msra.mxu0 %v342
  %433 = vmatpush.bf16.msra.mxu0 %v340
  %434 = vmatpush.bf16.msra.mxu0 %v338
  %435 = vmatmul.bf16.gmra.mxu0 %v207
  %v436 = vpop.f32.mrf.mxu0
  %v437 = vadd.f32 0.0, %v436
  %v438 = vpop.f32.mrf.mxu0
  %439 = vdwg.mxu0
  %440 = vmatpush.bf16.msra.mxu0 %v368
  %441 = vmatpush.bf16.msra.mxu0 %v366
  %442 = vmatpush.bf16.msra.mxu0 %v364
  %443 = vmatpush.bf16.msra.mxu0 %v362
  %444 = vmatpush.bf16.msra.mxu0 %v360
  %445 = vmatpush.bf16.msra.mxu0 %v358
  %446 = vmatpush.bf16.msra.mxu0 %v356
  %447 = vmatpush.bf16.msra.mxu0 %v354
  %448 = vmatmul.bf16.gmra.mxu0 %v208
  %v449 = vpop.f32.mrf.mxu0
  %v450 = vadd.f32 %v437, %v449
  %v451 = vpop.f32.mrf.mxu0
  %452 = vdwg.mxu0
  %v453 = vadd.f32 %v205, %v424
  %v454 = vadd.f32 %v206, %v450
  %v455 = vtanh.pop %v453
  %v456 = vtanh.pop %v454
  %s457 = smul.addr %s202, 8
  %s458 = scalar_lea.vmem [#allocation3], %s457
  %459 = vst [vmem:[%s458] sm:$0xff] %v455
  %460 = vst [vmem:[%s458 + $0x8] sm:$0xff] %v456
  %s461 = smul.u32 1, 2
  %s462 = smul.addr %s461, 8
  %s463 = scalar_lea.vmem [#allocation2], %s462
  %v464 = vld [vmem:[%s463] sm:$0xff]
  %v465 = vld [vmem:[%s463 + $0x8] sm:$0xff]
  %v466 = vpack.c.bf16 %v455, %v455
  %v467 = vpack.c.bf16 %v456, %v456
  %v468 = vld [vmem:[%s2] sm:$0xff]
  %v469 = vld [vmem:[%s2 + $0x8] sm:$0xff]
  %v470 = vld [vmem:[%s2 + $0x10] sm:$0xff]
  %v471 = vld [vmem:[%s2 + $0x18] sm:$0xff]
  %v472 = vld [vmem:[%s2 + $0x20] sm:$0xff]
  %v473 = vld [vmem:[%s2 + $0x28] sm:$0xff]
  %v474 = vld [vmem:[%s2 + $0x30] sm:$0xff]
  %v475 = vld [vmem:[%s2 + $0x38] sm:$0xff]
  %v476 = vld [vmem:[%s2 + $0x40] sm:$0xff]
  %v477 = vld [vmem:[%s2 + $0x48] sm:$0xff]
  %v478 = vld [vmem:[%s2 + $0x50] sm:$0xff]
  %v479 = vld [vmem:[%s2 + $0x58] sm:$0xff]
  %v480 = vld [vmem:[%s2 + $0x60] sm:$0xff]
  %v481 = vld [vmem:[%s2 + $0x68] sm:$0xff]
  %v482 = vld [vmem:[%s2 + $0x70] sm:$0xff]
  %v483 = vld [vmem:[%s2 + $0x78] sm:$0xff]
  %v484 = vld [vmem:[%s2 + $0x80] sm:$0xff]
  %v485 = vld [vmem:[%s2 + $0x88] sm:$0xff]
  %v486 = vld [vmem:[%s2 + $0x90] sm:$0xff]
  %v487 = vld [vmem:[%s2 + $0x98] sm:$0xff]
  %v488 = vld [vmem:[%s2 + $0xa0] sm:$0xff]
  %v489 = vld [vmem:[%s2 + $0xa8] sm:$0xff]
  %v490 = vld [vmem:[%s2 + $0xb0] sm:$0xff]
  %v491 = vld [vmem:[%s2 + $0xb8] sm:$0xff]
  %v492 = vld [vmem:[%s2 + $0xc0] sm:$0xff]
  %v493 = vld [vmem:[%s2 + $0xc8] sm:$0xff]
  %v494 = vld [vmem:[%s2 + $0xd0] sm:$0xff]
  %v495 = vld [vmem:[%s2 + $0xd8] sm:$0xff]
  %v496 = vld [vmem:[%s2 + $0xe0] sm:$0xff]
  %v497 = vld [vmem:[%s2 + $0xe8] sm:$0xff]
  %v498 = vld [vmem:[%s2 + $0xf0] sm:$0xff]
  %v499 = vld [vmem:[%s2 + $0xf8] sm:$0xff]
  %v532 = vunpack.c.l.b16 %v468
  %v533 = vunpack.c.h.b16 %v468
  %v534 = vunpack.c.l.b16 %v469
  %v535 = vunpack.c.h.b16 %v469
  %v536 = vunpack.c.l.b16 %v470
  %v537 = vunpack.c.h.b16 %v470
  %v538 = vunpack.c.l.b16 %v471
  %v539 = vunpack.c.h.b16 %v471
  %v540 = vunpack.c.l.b16 %v472
  %v541 = vunpack.c.h.b16 %v472
  %v542 = vunpack.c.l.b16 %v473
  %v543 = vunpack.c.h.b16 %v473
  %v544 = vunpack.c.l.b16 %v474
  %v545 = vunpack.c.h.b16 %v474
  %v546 = vunpack.c.l.b16 %v475
  %v547 = vunpack.c.h.b16 %v475
  %v548 = vunpack.c.l.b16 %v476
  %v549 = vunpack.c.h.b16 %v476
  %v550 = vunpack.c.l.b16 %v477
  %v551 = vunpack.c.h.b16 %v477
  %v552 = vunpack.c.l.b16 %v478
  %v553 = vunpack.c.h.b16 %v478
  %v554 = vunpack.c.l.b16 %v479
  %v555 = vunpack.c.h.b16 %v479
  %v556 = vunpack.c.l.b16 %v480
  %v557 = vunpack.c.h.b16 %v480
  %v558 = vunpack.c.l.b16 %v481
  %v559 = vunpack.c.h.b16 %v481
  %v560 = vunpack.c.l.b16 %v482
  %v561 = vunpack.c.h.b16 %v482
  %v562 = vunpack.c.l.b16 %v483
  %v563 = vunpack.c.h.b16 %v483
  %v564 = vunpack.c.l.b16 %v484
  %v565 = vunpack.c.h.b16 %v484
  %v566 = vunpack.c.l.b16 %v485
  %v567 = vunpack.c.h.b16 %v485
  %v568 = vunpack.c.l.b16 %v486
  %v569 = vunpack.c.h.b16 %v486
  %v570 = vunpack.c.l.b16 %v487
  %v571 = vunpack.c.h.b16 %v487
  %v572 = vunpack.c.l.b16 %v488
  %v573 = vunpack.c.h.b16 %v488
  %v574 = vunpack.c.l.b16 %v489
  %v575 = vunpack.c.h.b16 %v489
  %v576 = vunpack.c.l.b16 %v490
  %v577 = vunpack.c.h.b16 %v490
  %v578 = vunpack.c.l.b16 %v491
  %v579 = vunpack.c.h.b16 %v491
  %v580 = vunpack.c.l.b16 %v492
  %v581 = vunpack.c.h.b16 %v492
  %v582 = vunpack.c.l.b16 %v493
  %v583 = vunpack.c.h.b16 %v493
  %v584 = vunpack.c.l.b16 %v494
  %v585 = vunpack.c.h.b16 %v494
  %v586 = vunpack.c.l.b16 %v495
  %v587 = vunpack.c.h.b16 %v495
  %v588 = vunpack.c.l.b16 %v496
  %v589 = vunpack.c.h.b16 %v496
  %v590 = vunpack.c.l.b16 %v497
  %v591 = vunpack.c.h.b16 %v497
  %v592 = vunpack.c.l.b16 %v498
  %v593 = vunpack.c.h.b16 %v498
  %v594 = vunpack.c.l.b16 %v499
  %v595 = vunpack.c.h.b16 %v499
  %v596 = vpack.c.b16 %v534, %v532
  %v597 = vpack.c.b16 %v535, %v533
  %v598 = vpack.c.b16 %v538, %v536
  %v599 = vpack.c.b16 %v539, %v537
  %v600 = vpack.c.b16 %v542, %v540
  %v601 = vpack.c.b16 %v543, %v541
  %v602 = vpack.c.b16 %v546, %v544
  %v603 = vpack.c.b16 %v547, %v545
  %v604 = vpack.c.b16 %v550, %v548
  %v605 = vpack.c.b16 %v551, %v549
  %v606 = vpack.c.b16 %v554, %v552
  %v607 = vpack.c.b16 %v555, %v553
  %v608 = vpack.c.b16 %v558, %v556
  %v609 = vpack.c.b16 %v559, %v557
  %v610 = vpack.c.b16 %v562, %v560
  %v611 = vpack.c.b16 %v563, %v561
  %v612 = vpack.c.b16 %v566, %v564
  %v613 = vpack.c.b16 %v567, %v565
  %v614 = vpack.c.b16 %v570, %v568
  %v615 = vpack.c.b16 %v571, %v569
  %v616 = vpack.c.b16 %v574, %v572
  %v617 = vpack.c.b16 %v575, %v573
  %v618 = vpack.c.b16 %v578, %v576
  %v619 = vpack.c.b16 %v579, %v577
  %v620 = vpack.c.b16 %v582, %v580
  %v621 = vpack.c.b16 %v583, %v581
  %v622 = vpack.c.b16 %v586, %v584
  %v623 = vpack.c.b16 %v587, %v585
  %v624 = vpack.c.b16 %v590, %v588
  %v625 = vpack.c.b16 %v591, %v589
  %v626 = vpack.c.b16 %v594, %v592
  %v627 = vpack.c.b16 %v595, %v593
  %660 = vmatpush.bf16.msra.mxu0 %v610
  %661 = vmatpush.bf16.msra.mxu0 %v608
  %662 = vmatpush.bf16.msra.mxu0 %v606
  %663 = vmatpush.bf16.msra.mxu0 %v604
  %664 = vmatpush.bf16.msra.mxu0 %v602
  %665 = vmatpush.bf16.msra.mxu0 %v600
  %666 = vmatpush.bf16.msra.mxu0 %v598
  %667 = vmatpush.bf16.msra.mxu0 %v596
  %668 = vmatmul.bf16.gmra.mxu0 %v466
  %v669 = vpop.f32.mrf.mxu0
  %v670 = vadd.f32 0.0, %v669
  %v671 = vpop.f32.mrf.mxu0
  %672 = vdwg.mxu0
  %673 = vmatpush.bf16.msra.mxu0 %v626
  %674 = vmatpush.bf16.msra.mxu0 %v624
  %675 = vmatpush.bf16.msra.mxu0 %v622
  %676 = vmatpush.bf16.msra.mxu0 %v620
  %677 = vmatpush.bf16.msra.mxu0 %v618
  %678 = vmatpush.bf16.msra.mxu0 %v616
  %679 = vmatpush.bf16.msra.mxu0 %v614
  %680 = vmatpush.bf16.msra.mxu0 %v612
  %681 = vmatmul.bf16.gmra.mxu0 %v467
  %v682 = vpop.f32.mrf.mxu0
  %v683 = vadd.f32 %v670, %v682
  %v684 = vpop.f32.mrf.mxu0
  %685 = vdwg.mxu0
  %686 = vmatpush.bf16.msra.mxu0 %v611
  %687 = vmatpush.bf16.msra.mxu0 %v609
  %688 = vmatpush.bf16.msra.mxu0 %v607
  %689 = vmatpush.bf16.msra.mxu0 %v605
  %690 = vmatpush.bf16.msra.mxu0 %v603
  %691 = vmatpush.bf16.msra.mxu0 %v601
  %692 = vmatpush.bf16.msra.mxu0 %v599
  %693 = vmatpush.bf16.msra.mxu0 %v597
  %694 = vmatmul.bf16.gmra.mxu0 %v466
  %v695 = vpop.f32.mrf.mxu0
  %v696 = vadd.f32 0.0, %v695
  %v697 = vpop.f32.mrf.mxu0
  %698 = vdwg.mxu0
  %699 = vmatpush.bf16.msra.mxu0 %v627
  %700 = vmatpush.bf16.msra.mxu0 %v625
  %701 = vmatpush.bf16.msra.mxu0 %v623
  %702 = vmatpush.bf16.msra.mxu0 %v621
  %703 = vmatpush.bf16.msra.mxu0 %v619
  %704 = vmatpush.bf16.msra.mxu0 %v617
  %705 = vmatpush.bf16.msra.mxu0 %v615
  %706 = vmatpush.bf16.msra.mxu0 %v613
  %707 = vmatmul.bf16.gmra.mxu0 %v467
  %v708 = vpop.f32.mrf.mxu0
  %v709 = vadd.f32 %v696, %v708
  %v710 = vpop.f32.mrf.mxu0
  %711 = vdwg.mxu0
  %v712 = vadd.f32 %v464, %v683
  %v713 = vadd.f32 %v465, %v709
  %v714 = vtanh.pop %v712
  %v715 = vtanh.pop %v713
  %s716 = smul.addr %s461, 8
  %s717 = scalar_lea.vmem [#allocation3], %s716
  %718 = vst [vmem:[%s717] sm:$0xff] %v714
  %719 = vst [vmem:[%s717 + $0x8] sm:$0xff] %v715
  %s720 = smul.u32 2, 2
  %s721 = smul.addr %s720, 8
  %s722 = scalar_lea.vmem [#allocation2], %s721
  %v723 = vld [vmem:[%s722] sm:$0xff]
  %v724 = vld [vmem:[%s722 + $0x8] sm:$0xff]
  %v725 = vpack.c.bf16 %v714, %v714
  %v726 = vpack.c.bf16 %v715, %v715
  %v727 = vld [vmem:[%s2] sm:$0xff]
  %v728 = vld [vmem:[%s2 + $0x8] sm:$0xff]
  %v729 = vld [vmem:[%s2 + $0x10] sm:$0xff]
  %v730 = vld [vmem:[%s2 + $0x18] sm:$0xff]
  %v731 = vld [vmem:[%s2 + $0x20] sm:$0xff]
  %v732 = vld [vmem:[%s2 + $0x28] sm:$0xff]
  %v733 = vld [vmem:[%s2 + $0x30] sm:$0xff]
  %v734 = vld [vmem:[%s2 + $0x38] sm:$0xff]
  %v735 = vld [vmem:[%s2 + $0x40] sm:$0xff]
  %v736 = vld [vmem:[%s2 + $0x48] sm:$0xff]
  %v737 = vld [vmem:[%s2 + $0x50] sm:$0xff]
  %v738 = vld [vmem:[%s2 + $0x58] sm:$0xff]
  %v739 = vld [vmem:[%s2 + $0x60] sm:$0xff]
  %v740 = vld [vmem:[%s2 + $0x68] sm:$0xff]
  %v741 = vld [vmem:[%s2 + $0x70] sm:$0xff]
  %v742 = vld [vmem:[%s2 + $0x78] sm:$0xff]
  %v743 = vld [vmem:[%s2 + $0x80] sm:$0xff]
  %v744 = vld [vmem:[%s2 + $0x88] sm:$0xff]
  %v745 = vld [vmem:[%s2 + $0x90] sm:$0xff]
  %v746 = vld [vmem:[%s2 + $0x98] sm:$0xff]
  %v747 = vld [vmem:[%s2 + $0xa0] sm:$0xff]
  %v748 = vld [vmem:[%s2 + $0xa8] sm:$0xff]
  %v749 = vld [vmem:[%s2 + $0xb0] sm:$0xff]
  %v750 = vld [vmem:[%s2 + $0xb8] sm:$0xff]
  %v751 = vld [vmem:[%s2 + $0xc0] sm:$0xff]
  %v752 = vld [vmem:[%s2 + $0xc8] sm:$0xff]
  %v753 = vld [vmem:[%s2 + $0xd0] sm:$0xff]
  %v754 = vld [vmem:[%s2 + $0xd8] sm:$0xff]
  %v755 = vld [vmem:[%s2 + $0xe0] sm:$0xff]
  %v756 = vld [vmem:[%s2 + $0xe8] sm:$0xff]
  %v757 = vld [vmem:[%s2 + $0xf0] sm:$0xff]
  %v758 = vld [vmem:[%s2 + $0xf8] sm:$0xff]
  %v791 = vunpack.c.l.b16 %v727
  %v792 = vunpack.c.h.b16 %v727
  %v793 = vunpack.c.l.b16 %v728
  %v794 = vunpack.c.h.b16 %v728
  %v795 = vunpack.c.l.b16 %v729
  %v796 = vunpack.c.h.b16 %v729
  %v797 = vunpack.c.l.b16 %v730
  %v798 = vunpack.c.h.b16 %v730
  %v799 = vunpack.c.l.b16 %v731
  %v800 = vunpack.c.h.b16 %v731
  %v801 = vunpack.c.l.b16 %v732
  %v802 = vunpack.c.h.b16 %v732
  %v803 = vunpack.c.l.b16 %v733
  %v804 = vunpack.c.h.b16 %v733
  %v805 = vunpack.c.l.b16 %v734
  %v806 = vunpack.c.h.b16 %v734
  %v807 = vunpack.c.l.b16 %v735
  %v808 = vunpack.c.h.b16 %v735
  %v809 = vunpack.c.l.b16 %v736
  %v810 = vunpack.c.h.b16 %v736
  %v811 = vunpack.c.l.b16 %v737
  %v812 = vunpack.c.h.b16 %v737
  %v813 = vunpack.c.l.b16 %v738
  %v814 = vunpack.c.h.b16 %v738
  %v815 = vunpack.c.l.b16 %v739
  %v816 = vunpack.c.h.b16 %v739
  %v817 = vunpack.c.l.b16 %v740
  %v818 = vunpack.c.h.b16 %v740
  %v819 = vunpack.c.l.b16 %v741
  %v820 = vunpack.c.h.b16 %v741
  %v821 = vunpack.c.l.b16 %v742
  %v822 = vunpack.c.h.b16 %v742
  %v823 = vunpack.c.l.b16 %v743
  %v824 = vunpack.c.h.b16 %v743
  %v825 = vunpack.c.l.b16 %v744
  %v826 = vunpack.c.h.b16 %v744
  %v827 = vunpack.c.l.b16 %v745
  %v828 = vunpack.c.h.b16 %v745
  %v829 = vunpack.c.l.b16 %v746
  %v830 = vunpack.c.h.b16 %v746
  %v831 = vunpack.c.l.b16 %v747
  %v832 = vunpack.c.h.b16 %v747
  %v833 = vunpack.c.l.b16 %v748
  %v834 = vunpack.c.h.b16 %v748
  %v835 = vunpack.c.l.b16 %v749
  %v836 = vunpack.c.h.b16 %v749
  %v837 = vunpack.c.l.b16 %v750
  %v838 = vunpack.c.h.b16 %v750
  %v839 = vunpack.c.l.b16 %v751
  %v840 = vunpack.c.h.b16 %v751
  %v841 = vunpack.c.l.b16 %v752
  %v842 = vunpack.c.h.b16 %v752
  %v843 = vunpack.c.l.b16 %v753
  %v844 = vunpack.c.h.b16 %v753
  %v845 = vunpack.c.l.b16 %v754
  %v846 = vunpack.c.h.b16 %v754
  %v847 = vunpack.c.l.b16 %v755
  %v848 = vunpack.c.h.b16 %v755
  %v849 = vunpack.c.l.b16 %v756
  %v850 = vunpack.c.h.b16 %v756
  %v851 = vunpack.c.l.b16 %v757
  %v852 = vunpack.c.h.b16 %v757
  %v853 = vunpack.c.l.b16 %v758
  %v854 = vunpack.c.h.b16 %v758
  %v855 = vpack.c.b16 %v793, %v791
  %v856 = vpack.c.b16 %v794, %v792
  %v857 = vpack.c.b16 %v797, %v795
  %v858 = vpack.c.b16 %v798, %v796
  %v859 = vpack.c.b16 %v801, %v799
  %v860 = vpack.c.b16 %v802, %v800
  %v861 = vpack.c.b16 %v805, %v803
  %v862 = vpack.c.b16 %v806, %v804
  %v863 = vpack.c.b16 %v809, %v807
  %v864 = vpack.c.b16 %v810, %v808
  %v865 = vpack.c.b16 %v813, %v811
  %v866 = vpack.c.b16 %v814, %v812
  %v867 = vpack.c.b16 %v817, %v815
  %v868 = vpack.c.b16 %v818, %v816
  %v869 = vpack.c.b16 %v821, %v819
  %v870 = vpack.c.b16 %v822, %v820
  %v871 = vpack.c.b16 %v825, %v823
  %v872 = vpack.c.b16 %v826, %v824
  %v873 = vpack.c.b16 %v829, %v827
  %v874 = vpack.c.b16 %v830, %v828
  %v875 = vpack.c.b16 %v833, %v831
  %v876 = vpack.c.b16 %v834, %v832
  %v877 = vpack.c.b16 %v837, %v835
  %v878 = vpack.c.b16 %v838, %v836
  %v879 = vpack.c.b16 %v841, %v839
  %v880 = vpack.c.b16 %v842, %v840
  %v881 = vpack.c.b16 %v845, %v843
  %v882 = vpack.c.b16 %v846, %v844
  %v883 = vpack.c.b16 %v849, %v847
  %v884 = vpack.c.b16 %v850, %v848
  %v885 = vpack.c.b16 %v853, %v851
  %v886 = vpack.c.b16 %v854, %v852
  %919 = vmatpush.bf16.msra.mxu0 %v869
  %920 = vmatpush.bf16.msra.mxu0 %v867
  %921 = vmatpush.bf16.msra.mxu0 %v865
  %922 = vmatpush.bf16.msra.mxu0 %v863
  %923 = vmatpush.bf16.msra.mxu0 %v861
  %924 = vmatpush.bf16.msra.mxu0 %v859
  %925 = vmatpush.bf16.msra.mxu0 %v857
  %926 = vmatpush.bf16.msra.mxu0 %v855
  %927 = vmatmul.bf16.gmra.mxu0 %v725
  %v928 = vpop.f32.mrf.mxu0
  %v929 = vadd.f32 0.0, %v928
  %v930 = vpop.f32.mrf.mxu0
  %931 = vdwg.mxu0
  %932 = vmatpush.bf16.msra.mxu0 %v885
  %933 = vmatpush.bf16.msra.mxu0 %v883
  %934 = vmatpush.bf16.msra.mxu0 %v881
  %935 = vmatpush.bf16.msra.mxu0 %v879
  %936 = vmatpush.bf16.msra.mxu0 %v877
  %937 = vmatpush.bf16.msra.mxu0 %v875
  %938 = vmatpush.bf16.msra.mxu0 %v873
  %939 = vmatpush.bf16.msra.mxu0 %v871
  %940 = vmatmul.bf16.gmra.mxu0 %v726
  %v941 = vpop.f32.mrf.mxu0
  %v942 = vadd.f32 %v929, %v941
  %v943 = vpop.f32.mrf.mxu0
  %944 = vdwg.mxu0
  %945 = vmatpush.bf16.msra.mxu0 %v870
  %946 = vmatpush.bf16.msra.mxu0 %v868
  %947 = vmatpush.bf16.msra.mxu0 %v866
  %948 = vmatpush.bf16.msra.mxu0 %v864
  %949 = vmatpush.bf16.msra.mxu0 %v862
  %950 = vmatpush.bf16.msra.mxu0 %v860
  %951 = vmatpush.bf16.msra.mxu0 %v858
  %952 = vmatpush.bf16.msra.mxu0 %v856
  %953 = vmatmul.bf16.gmra.mxu0 %v725
  %v954 = vpop.f32.mrf.mxu0
  %v955 = vadd.f32 0.0, %v954
  %v956 = vpop.f32.mrf.mxu0
  %957 = vdwg.mxu0
  %958 = vmatpush.bf16.msra.mxu0 %v886
  %959 = vmatpush.bf16.msra.mxu0 %v884
  %960 = vmatpush.bf16.msra.mxu0 %v882
  %961 = vmatpush.bf16.msra.mxu0 %v880
  %962 = vmatpush.bf16.msra.mxu0 %v878
  %963 = vmatpush.bf16.msra.mxu0 %v876
  %964 = vmatpush.bf16.msra.mxu0 %v874
  %965 = vmatpush.bf16.msra.mxu0 %v872
  %966 = vmatmul.bf16.gmra.mxu0 %v726
  %v967 = vpop.f32.mrf.mxu0
  %v968 = vadd.f32 %v955, %v967
  %v969 = vpop.f32.mrf.mxu0
  %970 = vdwg.mxu0
  %v971 = vadd.f32 %v723, %v942
  %v972 = vadd.f32 %v724, %v968
  %v973 = vtanh.pop %v971
  %v974 = vtanh.pop %v972
  %s975 = smul.addr %s720, 8
  %s976 = scalar_lea.vmem [#allocation3], %s975
  %977 = vst [vmem:[%s976] sm:$0xff] %v973
  %978 = vst [vmem:[%s976 + $0x8] sm:$0xff] %v974
  %s979 = smul.u32 3, 2
  %s980 = smul.addr %s979, 8
  %s981 = scalar_lea.vmem [#allocation2], %s980
  %v982 = vld [vmem:[%s981] sm:$0xff]
  %v983 = vld [vmem:[%s981 + $0x8] sm:$0xff]
  %v984 = vpack.c.bf16 %v973, %v973
  %v985 = vpack.c.bf16 %v974, %v974
  %v986 = vld [vmem:[%s2] sm:$0xff]
  %v987 = vld [vmem:[%s2 + $0x8] sm:$0xff]
  %v988 = vld [vmem:[%s2 + $0x10] sm:$0xff]
  %v989 = vld [vmem:[%s2 + $0x18] sm:$0xff]
  %v990 = vld [vmem:[%s2 + $0x20] sm:$0xff]
  %v991 = vld [vmem:[%s2 + $0x28] sm:$0xff]
  %v992 = vld [vmem:[%s2 + $0x30] sm:$0xff]
  %v993 = vld [vmem:[%s2 + $0x38] sm:$0xff]
  %v994 = vld [vmem:[%s2 + $0x40] sm:$0xff]
  %v995 = vld [vmem:[%s2 + $0x48] sm:$0xff]
  %v996 = vld [vmem:[%s2 + $0x50] sm:$0xff]
  %v997 = vld [vmem:[%s2 + $0x58] sm:$0xff]
  %v998 = vld [vmem:[%s2 + $0x60] sm:$0xff]
  %v999 = vld [vmem:[%s2 + $0x68] sm:$0xff]
  %v1000 = vld [vmem:[%s2 + $0x70] sm:$0xff]
  %v1001 = vld [vmem:[%s2 + $0x78] sm:$0xff]
  %v1002 = vld [vmem:[%s2 + $0x80] sm:$0xff]
  %v1003 = vld [vmem:[%s2 + $0x88] sm:$0xff]
  %v1004 = vld [vmem:[%s2 + $0x90] sm:$0xff]
  %v1005 = vld [vmem:[%s2 + $0x98] sm:$0xff]
  %v1006 = vld [vmem:[%s2 + $0xa0] sm:$0xff]
  %v1007 = vld [vmem:[%s2 + $0xa8] sm:$0xff]
  %v1008 = vld [vmem:[%s2 + $0xb0] sm:$0xff]
  %v1009 = vld [vmem:[%s2 + $0xb8] sm:$0xff]
  %v1010 = vld [vmem:[%s2 + $0xc0] sm:$0xff]
  %v1011 = vld [vmem:[%s2 + $0xc8] sm:$0xff]
  %v1012 = vld [vmem:[%s2 + $0xd0] sm:$0xff]
  %v1013 = vld [vmem:[%s2 + $0xd8] sm:$0xff]
  %v1014 = vld [vmem:[%s2 + $0xe0] sm:$0xff]
  %v1015 = vld [vmem:[%s2 + $0xe8] sm:$0xff]
  %v1016 = vld [vmem:[%s2 + $0xf0] sm:$0xff]
  %v1017 = vld [vmem:[%s2 + $0xf8] sm:$0xff]
  %v1050 = vunpack.c.l.b16 %v986
  %v1051 = vunpack.c.h.b16 %v986
  %v1052 = vunpack.c.l.b16 %v987
  %v1053 = vunpack.c.h.b16 %v987
  %v1054 = vunpack.c.l.b16 %v988
  %v1055 = vunpack.c.h.b16 %v988
  %v1056 = vunpack.c.l.b16 %v989
  %v1057 = vunpack.c.h.b16 %v989
  %v1058 = vunpack.c.l.b16 %v990
  %v1059 = vunpack.c.h.b16 %v990
  %v1060 = vunpack.c.l.b16 %v991
  %v1061 = vunpack.c.h.b16 %v991
  %v1062 = vunpack.c.l.b16 %v992
  %v1063 = vunpack.c.h.b16 %v992
  %v1064 = vunpack.c.l.b16 %v993
  %v1065 = vunpack.c.h.b16 %v993
  %v1066 = vunpack.c.l.b16 %v994
  %v1067 = vunpack.c.h.b16 %v994
  %v1068 = vunpack.c.l.b16 %v995
  %v1069 = vunpack.c.h.b16 %v995
  %v1070 = vunpack.c.l.b16 %v996
  %v1071 = vunpack.c.h.b16 %v996
  %v1072 = vunpack.c.l.b16 %v997
  %v1073 = vunpack.c.h.b16 %v997
  %v1074 = vunpack.c.l.b16 %v998
  %v1075 = vunpack.c.h.b16 %v998
  %v1076 = vunpack.c.l.b16 %v999
  %v1077 = vunpack.c.h.b16 %v999
  %v1078 = vunpack.c.l.b16 %v1000
  %v1079 = vunpack.c.h.b16 %v1000
  %v1080 = vunpack.c.l.b16 %v1001
  %v1081 = vunpack.c.h.b16 %v1001
  %v1082 = vunpack.c.l.b16 %v1002
  %v1083 = vunpack.c.h.b16 %v1002
  %v1084 = vunpack.c.l.b16 %v1003
  %v1085 = vunpack.c.h.b16 %v1003
  %v1086 = vunpack.c.l.b16 %v1004
  %v1087 = vunpack.c.h.b16 %v1004
  %v1088 = vunpack.c.l.b16 %v1005
  %v1089 = vunpack.c.h.b16 %v1005
  %v1090 = vunpack.c.l.b16 %v1006
  %v1091 = vunpack.c.h.b16 %v1006
  %v1092 = vunpack.c.l.b16 %v1007
  %v1093 = vunpack.c.h.b16 %v1007
  %v1094 = vunpack.c.l.b16 %v1008
  %v1095 = vunpack.c.h.b16 %v1008
  %v1096 = vunpack.c.l.b16 %v1009
  %v1097 = vunpack.c.h.b16 %v1009
  %v1098 = vunpack.c.l.b16 %v1010
  %v1099 = vunpack.c.h.b16 %v1010
  %v1100 = vunpack.c.l.b16 %v1011
  %v1101 = vunpack.c.h.b16 %v1011
  %v1102 = vunpack.c.l.b16 %v1012
  %v1103 = vunpack.c.h.b16 %v1012
  %v1104 = vunpack.c.l.b16 %v1013
  %v1105 = vunpack.c.h.b16 %v1013
  %v1106 = vunpack.c.l.b16 %v1014
  %v1107 = vunpack.c.h.b16 %v1014
  %v1108 = vunpack.c.l.b16 %v1015
  %v1109 = vunpack.c.h.b16 %v1015
  %v1110 = vunpack.c.l.b16 %v1016
  %v1111 = vunpack.c.h.b16 %v1016
  %v1112 = vunpack.c.l.b16 %v1017
  %v1113 = vunpack.c.h.b16 %v1017
  %v1114 = vpack.c.b16 %v1052, %v1050
  %v1115 = vpack.c.b16 %v1053, %v1051
  %v1116 = vpack.c.b16 %v1056, %v1054
  %v1117 = vpack.c.b16 %v1057, %v1055
  %v1118 = vpack.c.b16 %v1060, %v1058
  %v1119 = vpack.c.b16 %v1061, %v1059
  %v1120 = vpack.c.b16 %v1064, %v1062
  %v1121 = vpack.c.b16 %v1065, %v1063
  %v1122 = vpack.c.b16 %v1068, %v1066
  %v1123 = vpack.c.b16 %v1069, %v1067
  %v1124 = vpack.c.b16 %v1072, %v1070
  %v1125 = vpack.c.b16 %v1073, %v1071
  %v1126 = vpack.c.b16 %v1076, %v1074
  %v1127 = vpack.c.b16 %v1077, %v1075
  %v1128 = vpack.c.b16 %v1080, %v1078
  %v1129 = vpack.c.b16 %v1081, %v1079
  %v1130 = vpack.c.b16 %v1084, %v1082
  %v1131 = vpack.c.b16 %v1085, %v1083
  %v1132 = vpack.c.b16 %v1088, %v1086
  %v1133 = vpack.c.b16 %v1089, %v1087
  %v1134 = vpack.c.b16 %v1092, %v1090
  %v1135 = vpack.c.b16 %v1093, %v1091
  %v1136 = vpack.c.b16 %v1096, %v1094
  %v1137 = vpack.c.b16 %v1097, %v1095
  %v1138 = vpack.c.b16 %v1100, %v1098
  %v1139 = vpack.c.b16 %v1101, %v1099
  %v1140 = vpack.c.b16 %v1104, %v1102
  %v1141 = vpack.c.b16 %v1105, %v1103
  %v1142 = vpack.c.b16 %v1108, %v1106
  %v1143 = vpack.c.b16 %v1109, %v1107
  %v1144 = vpack.c.b16 %v1112, %v1110
  %v1145 = vpack.c.b16 %v1113, %v1111
  %1178 = vmatpush.bf16.msra.mxu0 %v1128
  %1179 = vmatpush.bf16.msra.mxu0 %v1126
  %1180 = vmatpush.bf16.msra.mxu0 %v1124
  %1181 = vmatpush.bf16.msra.mxu0 %v1122
  %1182 = vmatpush.bf16.msra.mxu0 %v1120
  %1183 = vmatpush.bf16.msra.mxu0 %v1118
  %1184 = vmatpush.bf16.msra.mxu0 %v1116
  %1185 = vmatpush.bf16.msra.mxu0 %v1114
  %1186 = vmatmul.bf16.gmra.mxu0 %v984
  %v1187 = vpop.f32.mrf.mxu0
  %v1188 = vadd.f32 0.0, %v1187
  %v1189 = vpop.f32.mrf.mxu0
  %1190 = vdwg.mxu0
  %1191 = vmatpush.bf16.msra.mxu0 %v1144
  %1192 = vmatpush.bf16.msra.mxu0 %v1142
  %1193 = vmatpush.bf16.msra.mxu0 %v1140
  %1194 = vmatpush.bf16.msra.mxu0 %v1138
  %1195 = vmatpush.bf16.msra.mxu0 %v1136
  %1196 = vmatpush.bf16.msra.mxu0 %v1134
  %1197 = vmatpush.bf16.msra.mxu0 %v1132
  %1198 = vmatpush.bf16.msra.mxu0 %v1130
  %1199 = vmatmul.bf16.gmra.mxu0 %v985
  %v1200 = vpop.f32.mrf.mxu0
  %v1201 = vadd.f32 %v1188, %v1200
  %v1202 = vpop.f32.mrf.mxu0
  %1203 = vdwg.mxu0
  %1204 = vmatpush.bf16.msra.mxu0 %v1129
  %1205 = vmatpush.bf16.msra.mxu0 %v1127
  %1206 = vmatpush.bf16.msra.mxu0 %v1125
  %1207 = vmatpush.bf16.msra.mxu0 %v1123
  %1208 = vmatpush.bf16.msra.mxu0 %v1121
  %1209 = vmatpush.bf16.msra.mxu0 %v1119
  %1210 = vmatpush.bf16.msra.mxu0 %v1117
  %1211 = vmatpush.bf16.msra.mxu0 %v1115
  %1212 = vmatmul.bf16.gmra.mxu0 %v984
  %v1213 = vpop.f32.mrf.mxu0
  %v1214 = vadd.f32 0.0, %v1213
  %v1215 = vpop.f32.mrf.mxu0
  %1216 = vdwg.mxu0
  %1217 = vmatpush.bf16.msra.mxu0 %v1145
  %1218 = vmatpush.bf16.msra.mxu0 %v1143
  %1219 = vmatpush.bf16.msra.mxu0 %v1141
  %1220 = vmatpush.bf16.msra.mxu0 %v1139
  %1221 = vmatpush.bf16.msra.mxu0 %v1137
  %1222 = vmatpush.bf16.msra.mxu0 %v1135
  %1223 = vmatpush.bf16.msra.mxu0 %v1133
  %1224 = vmatpush.bf16.msra.mxu0 %v1131
  %1225 = vmatmul.bf16.gmra.mxu0 %v985
  %v1226 = vpop.f32.mrf.mxu0
  %v1227 = vadd.f32 %v1214, %v1226
  %v1228 = vpop.f32.mrf.mxu0
  %1229 = vdwg.mxu0
  %v1230 = vadd.f32 %v982, %v1201
  %v1231 = vadd.f32 %v983, %v1227
  %v1232 = vtanh.pop %v1230
  %v1233 = vtanh.pop %v1231
  %s1234 = smul.addr %s979, 8
  %s1235 = scalar_lea.vmem [#allocation3], %s1234
  %1236 = vst [vmem:[%s1235] sm:$0xff] %v1232
  %1237 = vst [vmem:[%s1235 + $0x8] sm:$0xff] %v1233
  %s1238 = smul.u32 4, 2
  %s1239 = smul.addr %s1238, 8
  %s1240 = scalar_lea.vmem [#allocation2], %s1239
  %v1241 = vld [vmem:[%s1240] sm:$0xff]
  %v1242 = vld [vmem:[%s1240 + $0x8] sm:$0xff]
  %v1243 = vpack.c.bf16 %v1232, %v1232
  %v1244 = vpack.c.bf16 %v1233, %v1233
  %v1245 = vld [vmem:[%s2] sm:$0xff]
  %v1246 = vld [vmem:[%s2 + $0x8] sm:$0xff]
  %v1247 = vld [vmem:[%s2 + $0x10] sm:$0xff]
  %v1248 = vld [vmem:[%s2 + $0x18] sm:$0xff]
  %v1249 = vld [vmem:[%s2 + $0x20] sm:$0xff]
  %v1250 = vld [vmem:[%s2 + $0x28] sm:$0xff]
  %v1251 = vld [vmem:[%s2 + $0x30] sm:$0xff]
  %v1252 = vld [vmem:[%s2 + $0x38] sm:$0xff]
  %v1253 = vld [vmem:[%s2 + $0x40] sm:$0xff]
  %v1254 = vld [vmem:[%s2 + $0x48] sm:$0xff]
  %v1255 = vld [vmem:[%s2 + $0x50] sm:$0xff]
  %v1256 = vld [vmem:[%s2 + $0x58] sm:$0xff]
  %v1257 = vld [vmem:[%s2 + $0x60] sm:$0xff]
  %v1258 = vld [vmem:[%s2 + $0x68] sm:$0xff]
  %v1259 = vld [vmem:[%s2 + $0x70] sm:$0xff]
  %v1260 = vld [vmem:[%s2 + $0x78] sm:$0xff]
  %v1261 = vld [vmem:[%s2 + $0x80] sm:$0xff]
  %v1262 = vld [vmem:[%s2 + $0x88] sm:$0xff]
  %v1263 = vld [vmem:[%s2 + $0x90] sm:$0xff]
  %v1264 = vld [vmem:[%s2 + $0x98] sm:$0xff]
  %v1265 = vld [vmem:[%s2 + $0xa0] sm:$0xff]
  %v1266 = vld [vmem:[%s2 + $0xa8] sm:$0xff]
  %v1267 = vld [vmem:[%s2 + $0xb0] sm:$0xff]
  %v1268 = vld [vmem:[%s2 + $0xb8] sm:$0xff]
  %v1269 = vld [vmem:[%s2 + $0xc0] sm:$0xff]
  %v1270 = vld [vmem:[%s2 + $0xc8] sm:$0xff]
  %v1271 = vld [vmem:[%s2 + $0xd0] sm:$0xff]
  %v1272 = vld [vmem:[%s2 + $0xd8] sm:$0xff]
  %v1273 = vld [vmem:[%s2 + $0xe0] sm:$0xff]
  %v1274 = vld [vmem:[%s2 + $0xe8] sm:$0xff]
  %v1275 = vld [vmem:[%s2 + $0xf0] sm:$0xff]
  %v1276 = vld [vmem:[%s2 + $0xf8] sm:$0xff]
  %v1309 = vunpack.c.l.b16 %v1245
  %v1310 = vunpack.c.h.b16 %v1245
  %v1311 = vunpack.c.l.b16 %v1246
  %v1312 = vunpack.c.h.b16 %v1246
  %v1313 = vunpack.c.l.b16 %v1247
  %v1314 = vunpack.c.h.b16 %v1247
  %v1315 = vunpack.c.l.b16 %v1248
  %v1316 = vunpack.c.h.b16 %v1248
  %v1317 = vunpack.c.l.b16 %v1249
  %v1318 = vunpack.c.h.b16 %v1249
  %v1319 = vunpack.c.l.b16 %v1250
  %v1320 = vunpack.c.h.b16 %v1250
  %v1321 = vunpack.c.l.b16 %v1251
  %v1322 = vunpack.c.h.b16 %v1251
  %v1323 = vunpack.c.l.b16 %v1252
  %v1324 = vunpack.c.h.b16 %v1252
  %v1325 = vunpack.c.l.b16 %v1253
  %v1326 = vunpack.c.h.b16 %v1253
  %v1327 = vunpack.c.l.b16 %v1254
  %v1328 = vunpack.c.h.b16 %v1254
  %v1329 = vunpack.c.l.b16 %v1255
  %v1330 = vunpack.c.h.b16 %v1255
  %v1331 = vunpack.c.l.b16 %v1256
  %v1332 = vunpack.c.h.b16 %v1256
  %v1333 = vunpack.c.l.b16 %v1257
  %v1334 = vunpack.c.h.b16 %v1257
  %v1335 = vunpack.c.l.b16 %v1258
  %v1336 = vunpack.c.h.b16 %v1258
  %v1337 = vunpack.c.l.b16 %v1259
  %v1338 = vunpack.c.h.b16 %v1259
  %v1339 = vunpack.c.l.b16 %v1260
  %v1340 = vunpack.c.h.b16 %v1260
  %v1341 = vunpack.c.l.b16 %v1261
  %v1342 = vunpack.c.h.b16 %v1261
  %v1343 = vunpack.c.l.b16 %v1262
  %v1344 = vunpack.c.h.b16 %v1262
  %v1345 = vunpack.c.l.b16 %v1263
  %v1346 = vunpack.c.h.b16 %v1263
  %v1347 = vunpack.c.l.b16 %v1264
  %v1348 = vunpack.c.h.b16 %v1264
  %v1349 = vunpack.c.l.b16 %v1265
  %v1350 = vunpack.c.h.b16 %v1265
  %v1351 = vunpack.c.l.b16 %v1266
  %v1352 = vunpack.c.h.b16 %v1266
  %v1353 = vunpack.c.l.b16 %v1267
  %v1354 = vunpack.c.h.b16 %v1267
  %v1355 = vunpack.c.l.b16 %v1268
  %v1356 = vunpack.c.h.b16 %v1268
  %v1357 = vunpack.c.l.b16 %v1269
  %v1358 = vunpack.c.h.b16 %v1269
  %v1359 = vunpack.c.l.b16 %v1270
  %v1360 = vunpack.c.h.b16 %v1270
  %v1361 = vunpack.c.l.b16 %v1271
  %v1362 = vunpack.c.h.b16 %v1271
  %v1363 = vunpack.c.l.b16 %v1272
  %v1364 = vunpack.c.h.b16 %v1272
  %v1365 = vunpack.c.l.b16 %v1273
  %v1366 = vunpack.c.h.b16 %v1273
  %v1367 = vunpack.c.l.b16 %v1274
  %v1368 = vunpack.c.h.b16 %v1274
  %v1369 = vunpack.c.l.b16 %v1275
  %v1370 = vunpack.c.h.b16 %v1275
  %v1371 = vunpack.c.l.b16 %v1276
  %v1372 = vunpack.c.h.b16 %v1276
  %v1373 = vpack.c.b16 %v1311, %v1309
  %v1374 = vpack.c.b16 %v1312, %v1310
  %v1375 = vpack.c.b16 %v1315, %v1313
  %v1376 = vpack.c.b16 %v1316, %v1314
  %v1377 = vpack.c.b16 %v1319, %v1317
  %v1378 = vpack.c.b16 %v1320, %v1318
  %v1379 = vpack.c.b16 %v1323, %v1321
  %v1380 = vpack.c.b16 %v1324, %v1322
  %v1381 = vpack.c.b16 %v1327, %v1325
  %v1382 = vpack.c.b16 %v1328, %v1326
  %v1383 = vpack.c.b16 %v1331, %v1329
  %v1384 = vpack.c.b16 %v1332, %v1330
  %v1385 = vpack.c.b16 %v1335, %v1333
  %v1386 = vpack.c.b16 %v1336, %v1334
  %v1387 = vpack.c.b16 %v1339, %v1337
  %v1388 = vpack.c.b16 %v1340, %v1338
  %v1389 = vpack.c.b16 %v1343, %v1341
  %v1390 = vpack.c.b16 %v1344, %v1342
  %v1391 = vpack.c.b16 %v1347, %v1345
  %v1392 = vpack.c.b16 %v1348, %v1346
  %v1393 = vpack.c.b16 %v1351, %v1349
  %v1394 = vpack.c.b16 %v1352, %v1350
  %v1395 = vpack.c.b16 %v1355, %v1353
  %v1396 = vpack.c.b16 %v1356, %v1354
  %v1397 = vpack.c.b16 %v1359, %v1357
  %v1398 = vpack.c.b16 %v1360, %v1358
  %v1399 = vpack.c.b16 %v1363, %v1361
  %v1400 = vpack.c.b16 %v1364, %v1362
  %v1401 = vpack.c.b16 %v1367, %v1365
  %v1402 = vpack.c.b16 %v1368, %v1366
  %v1403 = vpack.c.b16 %v1371, %v1369
  %v1404 = vpack.c.b16 %v1372, %v1370
  %1437 = vmatpush.bf16.msra.mxu0 %v1387
  %1438 = vmatpush.bf16.msra.mxu0 %v1385
  %1439 = vmatpush.bf16.msra.mxu0 %v1383
  %1440 = vmatpush.bf16.msra.mxu0 %v1381
  %1441 = vmatpush.bf16.msra.mxu0 %v1379
  %1442 = vmatpush.bf16.msra.mxu0 %v1377
  %1443 = vmatpush.bf16.msra.mxu0 %v1375
  %1444 = vmatpush.bf16.msra.mxu0 %v1373
  %1445 = vmatmul.bf16.gmra.mxu0 %v1243
  %v1446 = vpop.f32.mrf.mxu0
  %v1447 = vadd.f32 0.0, %v1446
  %v1448 = vpop.f32.mrf.mxu0
  %1449 = vdwg.mxu0
  %1450 = vmatpush.bf16.msra.mxu0 %v1403
  %1451 = vmatpush.bf16.msra.mxu0 %v1401
  %1452 = vmatpush.bf16.msra.mxu0 %v1399
  %1453 = vmatpush.bf16.msra.mxu0 %v1397
  %1454 = vmatpush.bf16.msra.mxu0 %v1395
  %1455 = vmatpush.bf16.msra.mxu0 %v1393
  %1456 = vmatpush.bf16.msra.mxu0 %v1391
  %1457 = vmatpush.bf16.msra.mxu0 %v1389
  %1458 = vmatmul.bf16.gmra.mxu0 %v1244
  %v1459 = vpop.f32.mrf.mxu0
  %v1460 = vadd.f32 %v1447, %v1459
  %v1461 = vpop.f32.mrf.mxu0
  %1462 = vdwg.mxu0
  %1463 = vmatpush.bf16.msra.mxu0 %v1388
  %1464 = vmatpush.bf16.msra.mxu0 %v1386
  %1465 = vmatpush.bf16.msra.mxu0 %v1384
  %1466 = vmatpush.bf16.msra.mxu0 %v1382
  %1467 = vmatpush.bf16.msra.mxu0 %v1380
  %1468 = vmatpush.bf16.msra.mxu0 %v1378
  %1469 = vmatpush.bf16.msra.mxu0 %v1376
  %1470 = vmatpush.bf16.msra.mxu0 %v1374
  %1471 = vmatmul.bf16.gmra.mxu0 %v1243
  %v1472 = vpop.f32.mrf.mxu0
  %v1473 = vadd.f32 0.0, %v1472
  %v1474 = vpop.f32.mrf.mxu0
  %1475 = vdwg.mxu0
  %1476 = vmatpush.bf16.msra.mxu0 %v1404
  %1477 = vmatpush.bf16.msra.mxu0 %v1402
  %1478 = vmatpush.bf16.msra.mxu0 %v1400
  %1479 = vmatpush.bf16.msra.mxu0 %v1398
  %1480 = vmatpush.bf16.msra.mxu0 %v1396
  %1481 = vmatpush.bf16.msra.mxu0 %v1394
  %1482 = vmatpush.bf16.msra.mxu0 %v1392
  %1483 = vmatpush.bf16.msra.mxu0 %v1390
  %1484 = vmatmul.bf16.gmra.mxu0 %v1244
  %v1485 = vpop.f32.mrf.mxu0
  %v1486 = vadd.f32 %v1473, %v1485
  %v1487 = vpop.f32.mrf.mxu0
  %1488 = vdwg.mxu0
  %v1489 = vadd.f32 %v1241, %v1460
  %v1490 = vadd.f32 %v1242, %v1486
  %v1491 = vtanh.pop %v1489
  %v1492 = vtanh.pop %v1490
  %s1493 = smul.addr %s1238, 8
  %s1494 = scalar_lea.vmem [#allocation3], %s1493
  %1495 = vst [vmem:[%s1494] sm:$0xff] %v1491
  %1496 = vst [vmem:[%s1494 + $0x8] sm:$0xff] %v1492
  %s1497 = smul.u32 5, 2
  %s1498 = smul.addr %s1497, 8
  %s1499 = scalar_lea.vmem [#allocation2], %s1498
  %v1500 = vld [vmem:[%s1499] sm:$0xff]
  %v1501 = vld [vmem:[%s1499 + $0x8] sm:$0xff]
  %v1502 = vpack.c.bf16 %v1491, %v1491
  %v1503 = vpack.c.bf16 %v1492, %v1492
  %v1504 = vld [vmem:[%s2] sm:$0xff]
  %v1505 = vld [vmem:[%s2 + $0x8] sm:$0xff]
  %v1506 = vld [vmem:[%s2 + $0x10] sm:$0xff]
  %v1507 = vld [vmem:[%s2 + $0x18] sm:$0xff]
  %v1508 = vld [vmem:[%s2 + $0x20] sm:$0xff]
  %v1509 = vld [vmem:[%s2 + $0x28] sm:$0xff]
  %v1510 = vld [vmem:[%s2 + $0x30] sm:$0xff]
  %v1511 = vld [vmem:[%s2 + $0x38] sm:$0xff]
  %v1512 = vld [vmem:[%s2 + $0x40] sm:$0xff]
  %v1513 = vld [vmem:[%s2 + $0x48] sm:$0xff]
  %v1514 = vld [vmem:[%s2 + $0x50] sm:$0xff]
  %v1515 = vld [vmem:[%s2 + $0x58] sm:$0xff]
  %v1516 = vld [vmem:[%s2 + $0x60] sm:$0xff]
  %v1517 = vld [vmem:[%s2 + $0x68] sm:$0xff]
  %v1518 = vld [vmem:[%s2 + $0x70] sm:$0xff]
  %v1519 = vld [vmem:[%s2 + $0x78] sm:$0xff]
  %v1520 = vld [vmem:[%s2 + $0x80] sm:$0xff]
  %v1521 = vld [vmem:[%s2 + $0x88] sm:$0xff]
  %v1522 = vld [vmem:[%s2 + $0x90] sm:$0xff]
  %v1523 = vld [vmem:[%s2 + $0x98] sm:$0xff]
  %v1524 = vld [vmem:[%s2 + $0xa0] sm:$0xff]
  %v1525 = vld [vmem:[%s2 + $0xa8] sm:$0xff]
  %v1526 = vld [vmem:[%s2 + $0xb0] sm:$0xff]
  %v1527 = vld [vmem:[%s2 + $0xb8] sm:$0xff]
  %v1528 = vld [vmem:[%s2 + $0xc0] sm:$0xff]
  %v1529 = vld [vmem:[%s2 + $0xc8] sm:$0xff]
  %v1530 = vld [vmem:[%s2 + $0xd0] sm:$0xff]
  %v1531 = vld [vmem:[%s2 + $0xd8] sm:$0xff]
  %v1532 = vld [vmem:[%s2 + $0xe0] sm:$0xff]
  %v1533 = vld [vmem:[%s2 + $0xe8] sm:$0xff]
  %v1534 = vld [vmem:[%s2 + $0xf0] sm:$0xff]
  %v1535 = vld [vmem:[%s2 + $0xf8] sm:$0xff]
  %v1568 = vunpack.c.l.b16 %v1504
  %v1569 = vunpack.c.h.b16 %v1504
  %v1570 = vunpack.c.l.b16 %v1505
  %v1571 = vunpack.c.h.b16 %v1505
  %v1572 = vunpack.c.l.b16 %v1506
  %v1573 = vunpack.c.h.b16 %v1506
  %v1574 = vunpack.c.l.b16 %v1507
  %v1575 = vunpack.c.h.b16 %v1507
  %v1576 = vunpack.c.l.b16 %v1508
  %v1577 = vunpack.c.h.b16 %v1508
  %v1578 = vunpack.c.l.b16 %v1509
  %v1579 = vunpack.c.h.b16 %v1509
  %v1580 = vunpack.c.l.b16 %v1510
  %v1581 = vunpack.c.h.b16 %v1510
  %v1582 = vunpack.c.l.b16 %v1511
  %v1583 = vunpack.c.h.b16 %v1511
  %v1584 = vunpack.c.l.b16 %v1512
  %v1585 = vunpack.c.h.b16 %v1512
  %v1586 = vunpack.c.l.b16 %v1513
  %v1587 = vunpack.c.h.b16 %v1513
  %v1588 = vunpack.c.l.b16 %v1514
  %v1589 = vunpack.c.h.b16 %v1514
  %v1590 = vunpack.c.l.b16 %v1515
  %v1591 = vunpack.c.h.b16 %v1515
  %v1592 = vunpack.c.l.b16 %v1516
  %v1593 = vunpack.c.h.b16 %v1516
  %v1594 = vunpack.c.l.b16 %v1517
  %v1595 = vunpack.c.h.b16 %v1517
  %v1596 = vunpack.c.l.b16 %v1518
  %v1597 = vunpack.c.h.b16 %v1518
  %v1598 = vunpack.c.l.b16 %v1519
  %v1599 = vunpack.c.h.b16 %v1519
  %v1600 = vunpack.c.l.b16 %v1520
  %v1601 = vunpack.c.h.b16 %v1520
  %v1602 = vunpack.c.l.b16 %v1521
  %v1603 = vunpack.c.h.b16 %v1521
  %v1604 = vunpack.c.l.b16 %v1522
  %v1605 = vunpack.c.h.b16 %v1522
  %v1606 = vunpack.c.l.b16 %v1523
  %v1607 = vunpack.c.h.b16 %v1523
  %v1608 = vunpack.c.l.b16 %v1524
  %v1609 = vunpack.c.h.b16 %v1524
  %v1610 = vunpack.c.l.b16 %v1525
  %v1611 = vunpack.c.h.b16 %v1525
  %v1612 = vunpack.c.l.b16 %v1526
  %v1613 = vunpack.c.h.b16 %v1526
  %v1614 = vunpack.c.l.b16 %v1527
  %v1615 = vunpack.c.h.b16 %v1527
  %v1616 = vunpack.c.l.b16 %v1528
  %v1617 = vunpack.c.h.b16 %v1528
  %v1618 = vunpack.c.l.b16 %v1529
  %v1619 = vunpack.c.h.b16 %v1529
  %v1620 = vunpack.c.l.b16 %v1530
  %v1621 = vunpack.c.h.b16 %v1530
  %v1622 = vunpack.c.l.b16 %v1531
  %v1623 = vunpack.c.h.b16 %v1531
  %v1624 = vunpack.c.l.b16 %v1532
  %v1625 = vunpack.c.h.b16 %v1532
  %v1626 = vunpack.c.l.b16 %v1533
  %v1627 = vunpack.c.h.b16 %v1533
  %v1628 = vunpack.c.l.b16 %v1534
  %v1629 = vunpack.c.h.b16 %v1534
  %v1630 = vunpack.c.l.b16 %v1535
  %v1631 = vunpack.c.h.b16 %v1535
  %v1632 = vpack.c.b16 %v1570, %v1568
  %v1633 = vpack.c.b16 %v1571, %v1569
  %v1634 = vpack.c.b16 %v1574, %v1572
  %v1635 = vpack.c.b16 %v1575, %v1573
  %v1636 = vpack.c.b16 %v1578, %v1576
  %v1637 = vpack.c.b16 %v1579, %v1577
  %v1638 = vpack.c.b16 %v1582, %v1580
  %v1639 = vpack.c.b16 %v1583, %v1581
  %v1640 = vpack.c.b16 %v1586, %v1584
  %v1641 = vpack.c.b16 %v1587, %v1585
  %v1642 = vpack.c.b16 %v1590, %v1588
  %v1643 = vpack.c.b16 %v1591, %v1589
  %v1644 = vpack.c.b16 %v1594, %v1592
  %v1645 = vpack.c.b16 %v1595, %v1593
  %v1646 = vpack.c.b16 %v1598, %v1596
  %v1647 = vpack.c.b16 %v1599, %v1597
  %v1648 = vpack.c.b16 %v1602, %v1600
  %v1649 = vpack.c.b16 %v1603, %v1601
  %v1650 = vpack.c.b16 %v1606, %v1604
  %v1651 = vpack.c.b16 %v1607, %v1605
  %v1652 = vpack.c.b16 %v1610, %v1608
  %v1653 = vpack.c.b16 %v1611, %v1609
  %v1654 = vpack.c.b16 %v1614, %v1612
  %v1655 = vpack.c.b16 %v1615, %v1613
  %v1656 = vpack.c.b16 %v1618, %v1616
  %v1657 = vpack.c.b16 %v1619, %v1617
  %v1658 = vpack.c.b16 %v1622, %v1620
  %v1659 = vpack.c.b16 %v1623, %v1621
  %v1660 = vpack.c.b16 %v1626, %v1624
  %v1661 = vpack.c.b16 %v1627, %v1625
  %v1662 = vpack.c.b16 %v1630, %v1628
  %v1663 = vpack.c.b16 %v1631, %v1629
  %1696 = vmatpush.bf16.msra.mxu0 %v1646
  %1697 = vmatpush.bf16.msra.mxu0 %v1644
  %1698 = vmatpush.bf16.msra.mxu0 %v1642
  %1699 = vmatpush.bf16.msra.mxu0 %v1640
  %1700 = vmatpush.bf16.msra.mxu0 %v1638
  %1701 = vmatpush.bf16.msra.mxu0 %v1636
  %1702 = vmatpush.bf16.msra.mxu0 %v1634
  %1703 = vmatpush.bf16.msra.mxu0 %v1632
  %1704 = vmatmul.bf16.gmra.mxu0 %v1502
  %v1705 = vpop.f32.mrf.mxu0
  %v1706 = vadd.f32 0.0, %v1705
  %v1707 = vpop.f32.mrf.mxu0
  %1708 = vdwg.mxu0
  %1709 = vmatpush.bf16.msra.mxu0 %v1662
  %1710 = vmatpush.bf16.msra.mxu0 %v1660
  %1711 = vmatpush.bf16.msra.mxu0 %v1658
  %1712 = vmatpush.bf16.msra.mxu0 %v1656
  %1713 = vmatpush.bf16.msra.mxu0 %v1654
  %1714 = vmatpush.bf16.msra.mxu0 %v1652
  %1715 = vmatpush.bf16.msra.mxu0 %v1650
  %1716 = vmatpush.bf16.msra.mxu0 %v1648
  %1717 = vmatmul.bf16.gmra.mxu0 %v1503
  %v1718 = vpop.f32.mrf.mxu0
  %v1719 = vadd.f32 %v1706, %v1718
  %v1720 = vpop.f32.mrf.mxu0
  %1721 = vdwg.mxu0
  %1722 = vmatpush.bf16.msra.mxu0 %v1647
  %1723 = vmatpush.bf16.msra.mxu0 %v1645
  %1724 = vmatpush.bf16.msra.mxu0 %v1643
  %1725 = vmatpush.bf16.msra.mxu0 %v1641
  %1726 = vmatpush.bf16.msra.mxu0 %v1639
  %1727 = vmatpush.bf16.msra.mxu0 %v1637
  %1728 = vmatpush.bf16.msra.mxu0 %v1635
  %1729 = vmatpush.bf16.msra.mxu0 %v1633
  %1730 = vmatmul.bf16.gmra.mxu0 %v1502
  %v1731 = vpop.f32.mrf.mxu0
  %v1732 = vadd.f32 0.0, %v1731
  %v1733 = vpop.f32.mrf.mxu0
  %1734 = vdwg.mxu0
  %1735 = vmatpush.bf16.msra.mxu0 %v1663
  %1736 = vmatpush.bf16.msra.mxu0 %v1661
  %1737 = vmatpush.bf16.msra.mxu0 %v1659
  %1738 = vmatpush.bf16.msra.mxu0 %v1657
  %1739 = vmatpush.bf16.msra.mxu0 %v1655
  %1740 = vmatpush.bf16.msra.mxu0 %v1653
  %1741 = vmatpush.bf16.msra.mxu0 %v1651
  %1742 = vmatpush.bf16.msra.mxu0 %v1649
  %1743 = vmatmul.bf16.gmra.mxu0 %v1503
  %v1744 = vpop.f32.mrf.mxu0
  %v1745 = vadd.f32 %v1732, %v1744
  %v1746 = vpop.f32.mrf.mxu0
  %1747 = vdwg.mxu0
  %v1748 = vadd.f32 %v1500, %v1719
  %v1749 = vadd.f32 %v1501, %v1745
  %v1750 = vtanh.pop %v1748
  %v1751 = vtanh.pop %v1749
  %s1752 = smul.addr %s1497, 8
  %s1753 = scalar_lea.vmem [#allocation3], %s1752
  %1754 = vst [vmem:[%s1753] sm:$0xff] %v1750
  %1755 = vst [vmem:[%s1753 + $0x8] sm:$0xff] %v1751
  %s1756 = smul.u32 6, 2
  %s1757 = smul.addr %s1756, 8
  %s1758 = scalar_lea.vmem [#allocation2], %s1757
  %v1759 = vld [vmem:[%s1758] sm:$0xff]
  %v1760 = vld [vmem:[%s1758 + $0x8] sm:$0xff]
  %v1761 = vpack.c.bf16 %v1750, %v1750
  %v1762 = vpack.c.bf16 %v1751, %v1751
  %v1763 = vld [vmem:[%s2] sm:$0xff]
  %v1764 = vld [vmem:[%s2 + $0x8] sm:$0xff]
  %v1765 = vld [vmem:[%s2 + $0x10] sm:$0xff]
  %v1766 = vld [vmem:[%s2 + $0x18] sm:$0xff]
  %v1767 = vld [vmem:[%s2 + $0x20] sm:$0xff]
  %v1768 = vld [vmem:[%s2 + $0x28] sm:$0xff]
  %v1769 = vld [vmem:[%s2 + $0x30] sm:$0xff]
  %v1770 = vld [vmem:[%s2 + $0x38] sm:$0xff]
  %v1771 = vld [vmem:[%s2 + $0x40] sm:$0xff]
  %v1772 = vld [vmem:[%s2 + $0x48] sm:$0xff]
  %v1773 = vld [vmem:[%s2 + $0x50] sm:$0xff]
  %v1774 = vld [vmem:[%s2 + $0x58] sm:$0xff]
  %v1775 = vld [vmem:[%s2 + $0x60] sm:$0xff]
  %v1776 = vld [vmem:[%s2 + $0x68] sm:$0xff]
  %v1777 = vld [vmem:[%s2 + $0x70] sm:$0xff]
  %v1778 = vld [vmem:[%s2 + $0x78] sm:$0xff]
  %v1779 = vld [vmem:[%s2 + $0x80] sm:$0xff]
  %v1780 = vld [vmem:[%s2 + $0x88] sm:$0xff]
  %v1781 = vld [vmem:[%s2 + $0x90] sm:$0xff]
  %v1782 = vld [vmem:[%s2 + $0x98] sm:$0xff]
  %v1783 = vld [vmem:[%s2 + $0xa0] sm:$0xff]
  %v1784 = vld [vmem:[%s2 + $0xa8] sm:$0xff]
  %v1785 = vld [vmem:[%s2 + $0xb0] sm:$0xff]
  %v1786 = vld [vmem:[%s2 + $0xb8] sm:$0xff]
  %v1787 = vld [vmem:[%s2 + $0xc0] sm:$0xff]
  %v1788 = vld [vmem:[%s2 + $0xc8] sm:$0xff]
  %v1789 = vld [vmem:[%s2 + $0xd0] sm:$0xff]
  %v1790 = vld [vmem:[%s2 + $0xd8] sm:$0xff]
  %v1791 = vld [vmem:[%s2 + $0xe0] sm:$0xff]
  %v1792 = vld [vmem:[%s2 + $0xe8] sm:$0xff]
  %v1793 = vld [vmem:[%s2 + $0xf0] sm:$0xff]
  %v1794 = vld [vmem:[%s2 + $0xf8] sm:$0xff]
  %v1827 = vunpack.c.l.b16 %v1763
  %v1828 = vunpack.c.h.b16 %v1763
  %v1829 = vunpack.c.l.b16 %v1764
  %v1830 = vunpack.c.h.b16 %v1764
  %v1831 = vunpack.c.l.b16 %v1765
  %v1832 = vunpack.c.h.b16 %v1765
  %v1833 = vunpack.c.l.b16 %v1766
  %v1834 = vunpack.c.h.b16 %v1766
  %v1835 = vunpack.c.l.b16 %v1767
  %v1836 = vunpack.c.h.b16 %v1767
  %v1837 = vunpack.c.l.b16 %v1768
  %v1838 = vunpack.c.h.b16 %v1768
  %v1839 = vunpack.c.l.b16 %v1769
  %v1840 = vunpack.c.h.b16 %v1769
  %v1841 = vunpack.c.l.b16 %v1770
  %v1842 = vunpack.c.h.b16 %v1770
  %v1843 = vunpack.c.l.b16 %v1771
  %v1844 = vunpack.c.h.b16 %v1771
  %v1845 = vunpack.c.l.b16 %v1772
  %v1846 = vunpack.c.h.b16 %v1772
  %v1847 = vunpack.c.l.b16 %v1773
  %v1848 = vunpack.c.h.b16 %v1773
  %v1849 = vunpack.c.l.b16 %v1774
  %v1850 = vunpack.c.h.b16 %v1774
  %v1851 = vunpack.c.l.b16 %v1775
  %v1852 = vunpack.c.h.b16 %v1775
  %v1853 = vunpack.c.l.b16 %v1776
  %v1854 = vunpack.c.h.b16 %v1776
  %v1855 = vunpack.c.l.b16 %v1777
  %v1856 = vunpack.c.h.b16 %v1777
  %v1857 = vunpack.c.l.b16 %v1778
  %v1858 = vunpack.c.h.b16 %v1778
  %v1859 = vunpack.c.l.b16 %v1779
  %v1860 = vunpack.c.h.b16 %v1779
  %v1861 = vunpack.c.l.b16 %v1780
  %v1862 = vunpack.c.h.b16 %v1780
  %v1863 = vunpack.c.l.b16 %v1781
  %v1864 = vunpack.c.h.b16 %v1781
  %v1865 = vunpack.c.l.b16 %v1782
  %v1866 = vunpack.c.h.b16 %v1782
  %v1867 = vunpack.c.l.b16 %v1783
  %v1868 = vunpack.c.h.b16 %v1783
  %v1869 = vunpack.c.l.b16 %v1784
  %v1870 = vunpack.c.h.b16 %v1784
  %v1871 = vunpack.c.l.b16 %v1785
  %v1872 = vunpack.c.h.b16 %v1785
  %v1873 = vunpack.c.l.b16 %v1786
  %v1874 = vunpack.c.h.b16 %v1786
  %v1875 = vunpack.c.l.b16 %v1787
  %v1876 = vunpack.c.h.b16 %v1787
  %v1877 = vunpack.c.l.b16 %v1788
  %v1878 = vunpack.c.h.b16 %v1788
  %v1879 = vunpack.c.l.b16 %v1789
  %v1880 = vunpack.c.h.b16 %v1789
  %v1881 = vunpack.c.l.b16 %v1790
  %v1882 = vunpack.c.h.b16 %v1790
  %v1883 = vunpack.c.l.b16 %v1791
  %v1884 = vunpack.c.h.b16 %v1791
  %v1885 = vunpack.c.l.b16 %v1792
  %v1886 = vunpack.c.h.b16 %v1792
  %v1887 = vunpack.c.l.b16 %v1793
  %v1888 = vunpack.c.h.b16 %v1793
  %v1889 = vunpack.c.l.b16 %v1794
  %v1890 = vunpack.c.h.b16 %v1794
  %v1891 = vpack.c.b16 %v1829, %v1827
  %v1892 = vpack.c.b16 %v1830, %v1828
  %v1893 = vpack.c.b16 %v1833, %v1831
  %v1894 = vpack.c.b16 %v1834, %v1832
  %v1895 = vpack.c.b16 %v1837, %v1835
  %v1896 = vpack.c.b16 %v1838, %v1836
  %v1897 = vpack.c.b16 %v1841, %v1839
  %v1898 = vpack.c.b16 %v1842, %v1840
  %v1899 = vpack.c.b16 %v1845, %v1843
  %v1900 = vpack.c.b16 %v1846, %v1844
  %v1901 = vpack.c.b16 %v1849, %v1847
  %v1902 = vpack.c.b16 %v1850, %v1848
  %v1903 = vpack.c.b16 %v1853, %v1851
  %v1904 = vpack.c.b16 %v1854, %v1852
  %v1905 = vpack.c.b16 %v1857, %v1855
  %v1906 = vpack.c.b16 %v1858, %v1856
  %v1907 = vpack.c.b16 %v1861, %v1859
  %v1908 = vpack.c.b16 %v1862, %v1860
  %v1909 = vpack.c.b16 %v1865, %v1863
  %v1910 = vpack.c.b16 %v1866, %v1864
  %v1911 = vpack.c.b16 %v1869, %v1867
  %v1912 = vpack.c.b16 %v1870, %v1868
  %v1913 = vpack.c.b16 %v1873, %v1871
  %v1914 = vpack.c.b16 %v1874, %v1872
  %v1915 = vpack.c.b16 %v1877, %v1875
  %v1916 = vpack.c.b16 %v1878, %v1876
  %v1917 = vpack.c.b16 %v1881, %v1879
  %v1918 = vpack.c.b16 %v1882, %v1880
  %v1919 = vpack.c.b16 %v1885, %v1883
  %v1920 = vpack.c.b16 %v1886, %v1884
  %v1921 = vpack.c.b16 %v1889, %v1887
  %v1922 = vpack.c.b16 %v1890, %v1888
  %1955 = vmatpush.bf16.msra.mxu0 %v1905
  %1956 = vmatpush.bf16.msra.mxu0 %v1903
  %1957 = vmatpush.bf16.msra.mxu0 %v1901
  %1958 = vmatpush.bf16.msra.mxu0 %v1899
  %1959 = vmatpush.bf16.msra.mxu0 %v1897
  %1960 = vmatpush.bf16.msra.mxu0 %v1895
  %1961 = vmatpush.bf16.msra.mxu0 %v1893
  %1962 = vmatpush.bf16.msra.mxu0 %v1891
  %1963 = vmatmul.bf16.gmra.mxu0 %v1761
  %v1964 = vpop.f32.mrf.mxu0
  %v1965 = vadd.f32 0.0, %v1964
  %v1966 = vpop.f32.mrf.mxu0
  %1967 = vdwg.mxu0
  %1968 = vmatpush.bf16.msra.mxu0 %v1921
  %1969 = vmatpush.bf16.msra.mxu0 %v1919
  %1970 = vmatpush.bf16.msra.mxu0 %v1917
  %1971 = vmatpush.bf16.msra.mxu0 %v1915
  %1972 = vmatpush.bf16.msra.mxu0 %v1913
  %1973 = vmatpush.bf16.msra.mxu0 %v1911
  %1974 = vmatpush.bf16.msra.mxu0 %v1909
  %1975 = vmatpush.bf16.msra.mxu0 %v1907
  %1976 = vmatmul.bf16.gmra.mxu0 %v1762
  %v1977 = vpop.f32.mrf.mxu0
  %v1978 = vadd.f32 %v1965, %v1977
  %v1979 = vpop.f32.mrf.mxu0
  %1980 = vdwg.mxu0
  %1981 = vmatpush.bf16.msra.mxu0 %v1906
  %1982 = vmatpush.bf16.msra.mxu0 %v1904
  %1983 = vmatpush.bf16.msra.mxu0 %v1902
  %1984 = vmatpush.bf16.msra.mxu0 %v1900
  %1985 = vmatpush.bf16.msra.mxu0 %v1898
  %1986 = vmatpush.bf16.msra.mxu0 %v1896
  %1987 = vmatpush.bf16.msra.mxu0 %v1894
  %1988 = vmatpush.bf16.msra.mxu0 %v1892
  %1989 = vmatmul.bf16.gmra.mxu0 %v1761
  %v1990 = vpop.f32.mrf.mxu0
  %v1991 = vadd.f32 0.0, %v1990
  %v1992 = vpop.f32.mrf.mxu0
  %1993 = vdwg.mxu0
  %1994 = vmatpush.bf16.msra.mxu0 %v1922
  %1995 = vmatpush.bf16.msra.mxu0 %v1920
  %1996 = vmatpush.bf16.msra.mxu0 %v1918
  %1997 = vmatpush.bf16.msra.mxu0 %v1916
  %1998 = vmatpush.bf16.msra.mxu0 %v1914
  %1999 = vmatpush.bf16.msra.mxu0 %v1912
  %2000 = vmatpush.bf16.msra.mxu0 %v1910
  %2001 = vmatpush.bf16.msra.mxu0 %v1908
  %2002 = vmatmul.bf16.gmra.mxu0 %v1762
  %v2003 = vpop.f32.mrf.mxu0
  %v2004 = vadd.f32 %v1991, %v2003
  %v2005 = vpop.f32.mrf.mxu0
  %2006 = vdwg.mxu0
  %v2007 = vadd.f32 %v1759, %v1978
  %v2008 = vadd.f32 %v1760, %v2004
  %v2009 = vtanh.pop %v2007
  %v2010 = vtanh.pop %v2008
  %s2011 = smul.addr %s1756, 8
  %s2012 = scalar_lea.vmem [#allocation3], %s2011
  %2013 = vst [vmem:[%s2012] sm:$0xff] %v2009
  %2014 = vst [vmem:[%s2012 + $0x8] sm:$0xff] %v2010
  %s2015 = smul.u32 7, 2
  %s2016 = smul.addr %s2015, 8
  %s2017 = scalar_lea.vmem [#allocation2], %s2016
  %v2018 = vld [vmem:[%s2017] sm:$0xff]
  %v2019 = vld [vmem:[%s2017 + $0x8] sm:$0xff]
  %v2020 = vpack.c.bf16 %v2009, %v2009
  %v2021 = vpack.c.bf16 %v2010, %v2010
  %v2022 = vld [vmem:[%s2] sm:$0xff]
  %v2023 = vld [vmem:[%s2 + $0x8] sm:$0xff]
  %v2024 = vld [vmem:[%s2 + $0x10] sm:$0xff]
  %v2025 = vld [vmem:[%s2 + $0x18] sm:$0xff]
  %v2026 = vld [vmem:[%s2 + $0x20] sm:$0xff]
  %v2027 = vld [vmem:[%s2 + $0x28] sm:$0xff]
  %v2028 = vld [vmem:[%s2 + $0x30] sm:$0xff]
  %v2029 = vld [vmem:[%s2 + $0x38] sm:$0xff]
  %v2030 = vld [vmem:[%s2 + $0x40] sm:$0xff]
  %v2031 = vld [vmem:[%s2 + $0x48] sm:$0xff]
  %v2032 = vld [vmem:[%s2 + $0x50] sm:$0xff]
  %v2033 = vld [vmem:[%s2 + $0x58] sm:$0xff]
  %v2034 = vld [vmem:[%s2 + $0x60] sm:$0xff]
  %v2035 = vld [vmem:[%s2 + $0x68] sm:$0xff]
  %v2036 = vld [vmem:[%s2 + $0x70] sm:$0xff]
  %v2037 = vld [vmem:[%s2 + $0x78] sm:$0xff]
  %v2038 = vld [vmem:[%s2 + $0x80] sm:$0xff]
  %v2039 = vld [vmem:[%s2 + $0x88] sm:$0xff]
  %v2040 = vld [vmem:[%s2 + $0x90] sm:$0xff]
  %v2041 = vld [vmem:[%s2 + $0x98] sm:$0xff]
  %v2042 = vld [vmem:[%s2 + $0xa0] sm:$0xff]
  %v2043 = vld [vmem:[%s2 + $0xa8] sm:$0xff]
  %v2044 = vld [vmem:[%s2 + $0xb0] sm:$0xff]
  %v2045 = vld [vmem:[%s2 + $0xb8] sm:$0xff]
  %v2046 = vld [vmem:[%s2 + $0xc0] sm:$0xff]
  %v2047 = vld [vmem:[%s2 + $0xc8] sm:$0xff]
  %v2048 = vld [vmem:[%s2 + $0xd0] sm:$0xff]
  %v2049 = vld [vmem:[%s2 + $0xd8] sm:$0xff]
  %v2050 = vld [vmem:[%s2 + $0xe0] sm:$0xff]
  %v2051 = vld [vmem:[%s2 + $0xe8] sm:$0xff]
  %v2052 = vld [vmem:[%s2 + $0xf0] sm:$0xff]
  %v2053 = vld [vmem:[%s2 + $0xf8] sm:$0xff]
  %v2086 = vunpack.c.l.b16 %v2022
  %v2087 = vunpack.c.h.b16 %v2022
  %v2088 = vunpack.c.l.b16 %v2023
  %v2089 = vunpack.c.h.b16 %v2023
  %v2090 = vunpack.c.l.b16 %v2024
  %v2091 = vunpack.c.h.b16 %v2024
  %v2092 = vunpack.c.l.b16 %v2025
  %v2093 = vunpack.c.h.b16 %v2025
  %v2094 = vunpack.c.l.b16 %v2026
  %v2095 = vunpack.c.h.b16 %v2026
  %v2096 = vunpack.c.l.b16 %v2027
  %v2097 = vunpack.c.h.b16 %v2027
  %v2098 = vunpack.c.l.b16 %v2028
  %v2099 = vunpack.c.h.b16 %v2028
  %v2100 = vunpack.c.l.b16 %v2029
  %v2101 = vunpack.c.h.b16 %v2029
  %v2102 = vunpack.c.l.b16 %v2030
  %v2103 = vunpack.c.h.b16 %v2030
  %v2104 = vunpack.c.l.b16 %v2031
  %v2105 = vunpack.c.h.b16 %v2031
  %v2106 = vunpack.c.l.b16 %v2032
  %v2107 = vunpack.c.h.b16 %v2032
  %v2108 = vunpack.c.l.b16 %v2033
  %v2109 = vunpack.c.h.b16 %v2033
  %v2110 = vunpack.c.l.b16 %v2034
  %v2111 = vunpack.c.h.b16 %v2034
  %v2112 = vunpack.c.l.b16 %v2035
  %v2113 = vunpack.c.h.b16 %v2035
  %v2114 = vunpack.c.l.b16 %v2036
  %v2115 = vunpack.c.h.b16 %v2036
  %v2116 = vunpack.c.l.b16 %v2037
  %v2117 = vunpack.c.h.b16 %v2037
  %v2118 = vunpack.c.l.b16 %v2038
  %v2119 = vunpack.c.h.b16 %v2038
  %v2120 = vunpack.c.l.b16 %v2039
  %v2121 = vunpack.c.h.b16 %v2039
  %v2122 = vunpack.c.l.b16 %v2040
  %v2123 = vunpack.c.h.b16 %v2040
  %v2124 = vunpack.c.l.b16 %v2041
  %v2125 = vunpack.c.h.b16 %v2041
  %v2126 = vunpack.c.l.b16 %v2042
  %v2127 = vunpack.c.h.b16 %v2042
  %v2128 = vunpack.c.l.b16 %v2043
  %v2129 = vunpack.c.h.b16 %v2043
  %v2130 = vunpack.c.l.b16 %v2044
  %v2131 = vunpack.c.h.b16 %v2044
  %v2132 = vunpack.c.l.b16 %v2045
  %v2133 = vunpack.c.h.b16 %v2045
  %v2134 = vunpack.c.l.b16 %v2046
  %v2135 = vunpack.c.h.b16 %v2046
  %v2136 = vunpack.c.l.b16 %v2047
  %v2137 = vunpack.c.h.b16 %v2047
  %v2138 = vunpack.c.l.b16 %v2048
  %v2139 = vunpack.c.h.b16 %v2048
  %v2140 = vunpack.c.l.b16 %v2049
  %v2141 = vunpack.c.h.b16 %v2049
  %v2142 = vunpack.c.l.b16 %v2050
  %v2143 = vunpack.c.h.b16 %v2050
  %v2144 = vunpack.c.l.b16 %v2051
  %v2145 = vunpack.c.h.b16 %v2051
  %v2146 = vunpack.c.l.b16 %v2052
  %v2147 = vunpack.c.h.b16 %v2052
  %v2148 = vunpack.c.l.b16 %v2053
  %v2149 = vunpack.c.h.b16 %v2053
  %v2150 = vpack.c.b16 %v2088, %v2086
  %v2151 = vpack.c.b16 %v2089, %v2087
  %v2152 = vpack.c.b16 %v2092, %v2090
  %v2153 = vpack.c.b16 %v2093, %v2091
  %v2154 = vpack.c.b16 %v2096, %v2094
  %v2155 = vpack.c.b16 %v2097, %v2095
  %v2156 = vpack.c.b16 %v2100, %v2098
  %v2157 = vpack.c.b16 %v2101, %v2099
  %v2158 = vpack.c.b16 %v2104, %v2102
  %v2159 = vpack.c.b16 %v2105, %v2103
  %v2160 = vpack.c.b16 %v2108, %v2106
  %v2161 = vpack.c.b16 %v2109, %v2107
  %v2162 = vpack.c.b16 %v2112, %v2110
  %v2163 = vpack.c.b16 %v2113, %v2111
  %v2164 = vpack.c.b16 %v2116, %v2114
  %v2165 = vpack.c.b16 %v2117, %v2115
  %v2166 = vpack.c.b16 %v2120, %v2118
  %v2167 = vpack.c.b16 %v2121, %v2119
  %v2168 = vpack.c.b16 %v2124, %v2122
  %v2169 = vpack.c.b16 %v2125, %v2123
  %v2170 = vpack.c.b16 %v2128, %v2126
  %v2171 = vpack.c.b16 %v2129, %v2127
  %v2172 = vpack.c.b16 %v2132, %v2130
  %v2173 = vpack.c.b16 %v2133, %v2131
  %v2174 = vpack.c.b16 %v2136, %v2134
  %v2175 = vpack.c.b16 %v2137, %v2135
  %v2176 = vpack.c.b16 %v2140, %v2138
  %v2177 = vpack.c.b16 %v2141, %v2139
  %v2178 = vpack.c.b16 %v2144, %v2142
  %v2179 = vpack.c.b16 %v2145, %v2143
  %v2180 = vpack.c.b16 %v2148, %v2146
  %v2181 = vpack.c.b16 %v2149, %v2147
  %2214 = vmatpush.bf16.msra.mxu0 %v2164
  %2215 = vmatpush.bf16.msra.mxu0 %v2162
  %2216 = vmatpush.bf16.msra.mxu0 %v2160
  %2217 = vmatpush.bf16.msra.mxu0 %v2158
  %2218 = vmatpush.bf16.msra.mxu0 %v2156
  %2219 = vmatpush.bf16.msra.mxu0 %v2154
  %2220 = vmatpush.bf16.msra.mxu0 %v2152
  %2221 = vmatpush.bf16.msra.mxu0 %v2150
  %2222 = vmatmul.bf16.gmra.mxu0 %v2020
  %v2223 = vpop.f32.mrf.mxu0
  %v2224 = vadd.f32 0.0, %v2223
  %v2225 = vpop.f32.mrf.mxu0
  %2226 = vdwg.mxu0
  %2227 = vmatpush.bf16.msra.mxu0 %v2180
  %2228 = vmatpush.bf16.msra.mxu0 %v2178
  %2229 = vmatpush.bf16.msra.mxu0 %v2176
  %2230 = vmatpush.bf16.msra.mxu0 %v2174
  %2231 = vmatpush.bf16.msra.mxu0 %v2172
  %2232 = vmatpush.bf16.msra.mxu0 %v2170
  %2233 = vmatpush.bf16.msra.mxu0 %v2168
  %2234 = vmatpush.bf16.msra.mxu0 %v2166
  %2235 = vmatmul.bf16.gmra.mxu0 %v2021
  %v2236 = vpop.f32.mrf.mxu0
  %v2237 = vadd.f32 %v2224, %v2236
  %v2238 = vpop.f32.mrf.mxu0
  %2239 = vdwg.mxu0
  %2240 = vmatpush.bf16.msra.mxu0 %v2165
  %2241 = vmatpush.bf16.msra.mxu0 %v2163
  %2242 = vmatpush.bf16.msra.mxu0 %v2161
  %2243 = vmatpush.bf16.msra.mxu0 %v2159
  %2244 = vmatpush.bf16.msra.mxu0 %v2157
  %2245 = vmatpush.bf16.msra.mxu0 %v2155
  %2246 = vmatpush.bf16.msra.mxu0 %v2153
  %2247 = vmatpush.bf16.msra.mxu0 %v2151
  %2248 = vmatmul.bf16.gmra.mxu0 %v2020
  %v2249 = vpop.f32.mrf.mxu0
  %v2250 = vadd.f32 0.0, %v2249
  %v2251 = vpop.f32.mrf.mxu0
  %2252 = vdwg.mxu0
  %2253 = vmatpush.bf16.msra.mxu0 %v2181
  %2254 = vmatpush.bf16.msra.mxu0 %v2179
  %2255 = vmatpush.bf16.msra.mxu0 %v2177
  %2256 = vmatpush.bf16.msra.mxu0 %v2175
  %2257 = vmatpush.bf16.msra.mxu0 %v2173
  %2258 = vmatpush.bf16.msra.mxu0 %v2171
  %2259 = vmatpush.bf16.msra.mxu0 %v2169
  %2260 = vmatpush.bf16.msra.mxu0 %v2167
  %2261 = vmatmul.bf16.gmra.mxu0 %v2021
  %v2262 = vpop.f32.mrf.mxu0
  %v2263 = vadd.f32 %v2250, %v2262
  %v2264 = vpop.f32.mrf.mxu0
  %2265 = vdwg.mxu0
  %v2266 = vadd.f32 %v2018, %v2237
  %v2267 = vadd.f32 %v2019, %v2263
  %v2268 = vtanh.pop %v2266
  %v2269 = vtanh.pop %v2267
  %s2270 = smul.addr %s2015, 8
  %s2271 = scalar_lea.vmem [#allocation3], %s2270
  %2272 = vst [vmem:[%s2271] sm:$0xff] %v2268
  %2273 = vst [vmem:[%s2271 + $0x8] sm:$0xff] %v2269
  %2274 = vst [vmem:[#allocation4] sm:$0xff] %v2268
  %2275 = vst [vmem:[#allocation4 + $0x8] sm:$0xff] %v2269
  %v2276 = vld [vmem:[#allocation3] sm:$0xff]
  %v2277 = vld [vmem:[#allocation3 + $0x8] sm:$0xff]
  %v2278 = vld [vmem:[#allocation3 + $0x10] sm:$0xff]
  %v2279 = vld [vmem:[#allocation3 + $0x18] sm:$0xff]
  %v2280 = vld [vmem:[#allocation3 + $0x20] sm:$0xff]
  %v2281 = vld [vmem:[#allocation3 + $0x28] sm:$0xff]
  %v2282 = vld [vmem:[#allocation3 + $0x30] sm:$0xff]
  %v2283 = vld [vmem:[#allocation3 + $0x38] sm:$0xff]
  %v2284 = vld [vmem:[#allocation3 + $0x40] sm:$0xff]
  %v2285 = vld [vmem:[#allocation3 + $0x48] sm:$0xff]
  %v2286 = vld [vmem:[#allocation3 + $0x50] sm:$0xff]
  %v2287 = vld [vmem:[#allocation3 + $0x58] sm:$0xff]
  %v2288 = vld [vmem:[#allocation3 + $0x60] sm:$0xff]
  %v2289 = vld [vmem:[#allocation3 + $0x68] sm:$0xff]
  %v2290 = vld [vmem:[#allocation3 + $0x70] sm:$0xff]
  %v2291 = vld [vmem:[#allocation3 + $0x78] sm:$0xff]
  %v2292 = vpack.c.bf16 %v2278, %v2276
  %v2293 = vpack.c.bf16 %v2279, %v2277
  %v2294 = vpack.c.bf16 %v2282, %v2280
  %v2295 = vpack.c.bf16 %v2283, %v2281
  %v2296 = vpack.c.bf16 %v2286, %v2284
  %v2297 = vpack.c.bf16 %v2287, %v2285
  %v2298 = vpack.c.bf16 %v2290, %v2288
  %v2299 = vpack.c.bf16 %v2291, %v2289
  %v2300 = vld [vmem:[%s3] sm:$0xf]
  %v2301 = vld [vmem:[%s3 + $0x4] sm:$0xf]
  %v2302 = vld [vmem:[%s3 + $0x8] sm:$0xf]
  %v2303 = vld [vmem:[%s3 + $0xc] sm:$0xf]
  %v2304 = vld [vmem:[%s3 + $0x10] sm:$0xf]
  %v2305 = vld [vmem:[%s3 + $0x14] sm:$0xf]
  %v2306 = vld [vmem:[%s3 + $0x18] sm:$0xf]
  %v2307 = vld [vmem:[%s3 + $0x1c] sm:$0xf]
  %v2308 = vld [vmem:[%s3 + $0x20] sm:$0xf]
  %v2309 = vld [vmem:[%s3 + $0x24] sm:$0xf]
  %v2310 = vld [vmem:[%s3 + $0x28] sm:$0xf]
  %v2311 = vld [vmem:[%s3 + $0x2c] sm:$0xf]
  %v2312 = vld [vmem:[%s3 + $0x30] sm:$0xf]
  %v2313 = vld [vmem:[%s3 + $0x34] sm:$0xf]
  %v2314 = vld [vmem:[%s3 + $0x38] sm:$0xf]
  %v2315 = vld [vmem:[%s3 + $0x3c] sm:$0xf]
  %v2316 = vld [vmem:[%s3 + $0x40] sm:$0xf]
  %v2317 = vld [vmem:[%s3 + $0x44] sm:$0xf]
  %v2318 = vld [vmem:[%s3 + $0x48] sm:$0xf]
  %v2319 = vld [vmem:[%s3 + $0x4c] sm:$0xf]
  %v2320 = vld [vmem:[%s3 + $0x50] sm:$0xf]
  %v2321 = vld [vmem:[%s3 + $0x54] sm:$0xf]
  %v2322 = vld [vmem:[%s3 + $0x58] sm:$0xf]
  %v2323 = vld [vmem:[%s3 + $0x5c] sm:$0xf]
  %v2324 = vld [vmem:[%s3 + $0x60] sm:$0xf]
  %v2325 = vld [vmem:[%s3 + $0x64] sm:$0xf]
  %v2326 = vld [vmem:[%s3 + $0x68] sm:$0xf]
  %v2327 = vld [vmem:[%s3 + $0x6c] sm:$0xf]
  %v2328 = vld [vmem:[%s3 + $0x70] sm:$0xf]
  %v2329 = vld [vmem:[%s3 + $0x74] sm:$0xf]
  %v2330 = vld [vmem:[%s3 + $0x78] sm:$0xf]
  %v2331 = vld [vmem:[%s3 + $0x7c] sm:$0xf]
  %v2332 = vld [vmem:[%s4] sm:$0x1]
  %v2334 = vperm.slane %v2332, 0
  %v2368 = vunpack.c.l.b16 %v2300
  %v2369 = vunpack.c.l.b16 %v2301
  %v2370 = vunpack.c.l.b16 %v2302
  %v2371 = vunpack.c.l.b16 %v2303
  %v2372 = vunpack.c.l.b16 %v2304
  %v2373 = vunpack.c.l.b16 %v2305
  %v2374 = vunpack.c.l.b16 %v2306
  %v2375 = vunpack.c.l.b16 %v2307
  %v2376 = vunpack.c.l.b16 %v2308
  %v2377 = vunpack.c.l.b16 %v2309
  %v2378 = vunpack.c.l.b16 %v2310
  %v2379 = vunpack.c.l.b16 %v2311
  %v2380 = vunpack.c.l.b16 %v2312
  %v2381 = vunpack.c.l.b16 %v2313
  %v2382 = vunpack.c.l.b16 %v2314
  %v2383 = vunpack.c.l.b16 %v2315
  %v2384 = vunpack.c.l.b16 %v2316
  %v2385 = vunpack.c.l.b16 %v2317
  %v2386 = vunpack.c.l.b16 %v2318
  %v2387 = vunpack.c.l.b16 %v2319
  %v2388 = vunpack.c.l.b16 %v2320
  %v2389 = vunpack.c.l.b16 %v2321
  %v2390 = vunpack.c.l.b16 %v2322
  %v2391 = vunpack.c.l.b16 %v2323
  %v2392 = vunpack.c.l.b16 %v2324
  %v2393 = vunpack.c.l.b16 %v2325
  %v2394 = vunpack.c.l.b16 %v2326
  %v2395 = vunpack.c.l.b16 %v2327
  %v2396 = vunpack.c.l.b16 %v2328
  %v2397 = vunpack.c.l.b16 %v2329
  %v2398 = vunpack.c.l.b16 %v2330
  %v2399 = vunpack.c.l.b16 %v2331
  %v2400 = vpack.c.b16 %v2369, %v2368
  %v2401 = vpack.c.b16 %v2371, %v2370
  %v2402 = vpack.c.b16 %v2373, %v2372
  %v2403 = vpack.c.b16 %v2375, %v2374
  %v2404 = vpack.c.b16 %v2377, %v2376
  %v2405 = vpack.c.b16 %v2379, %v2378
  %v2406 = vpack.c.b16 %v2381, %v2380
  %v2407 = vpack.c.b16 %v2383, %v2382
  %v2408 = vpack.c.b16 %v2385, %v2384
  %v2409 = vpack.c.b16 %v2387, %v2386
  %v2410 = vpack.c.b16 %v2389, %v2388
  %v2411 = vpack.c.b16 %v2391, %v2390
  %v2412 = vpack.c.b16 %v2393, %v2392
  %v2413 = vpack.c.b16 %v2395, %v2394
  %v2414 = vpack.c.b16 %v2397, %v2396
  %v2415 = vpack.c.b16 %v2399, %v2398
  %2432 = vmatpush.bf16.msra.mxu0 %v2407
  %2433 = vmatpush.bf16.msra.mxu0 %v2406
  %2434 = vmatpush.bf16.msra.mxu0 %v2405
  %2435 = vmatpush.bf16.msra.mxu0 %v2404
  %2436 = vmatpush.bf16.msra.mxu0 %v2403
  %2437 = vmatpush.bf16.msra.mxu0 %v2402
  %2438 = vmatpush.bf16.msra.mxu0 %v2401
  %2439 = vmatpush.bf16.msra.mxu0 %v2400
  %2440 = vmatmul.bf16.gmra.mxu0 %v2292
  %v2441 = vpop.f32.mrf.mxu0
  %v2442 = vadd.f32 %v2334, %v2441
  %v2443 = vpop.f32.mrf.mxu0
  %v2444 = vadd.f32 %v2334, %v2443
  %2445 = vmatmul.bf16.gmra.mxu0 %v2294
  %v2446 = vpop.f32.mrf.mxu0
  %v2447 = vadd.f32 %v2334, %v2446
  %v2448 = vpop.f32.mrf.mxu0
  %v2449 = vadd.f32 %v2334, %v2448
  %2450 = vmatmul.bf16.gmra.mxu0 %v2296
  %v2451 = vpop.f32.mrf.mxu0
  %v2452 = vadd.f32 %v2334, %v2451
  %v2453 = vpop.f32.mrf.mxu0
  %v2454 = vadd.f32 %v2334, %v2453
  %2455 = vmatmul.bf16.gmra.mxu0 %v2298
  %v2456 = vpop.f32.mrf.mxu0
  %v2457 = vadd.f32 %v2334, %v2456
  %v2458 = vpop.f32.mrf.mxu0
  %v2459 = vadd.f32 %v2334, %v2458
  %2460 = vdwg.mxu0
  %2461 = vmatpush.bf16.msra.mxu0 %v2415
  %2462 = vmatpush.bf16.msra.mxu0 %v2414
  %2463 = vmatpush.bf16.msra.mxu0 %v2413
  %2464 = vmatpush.bf16.msra.mxu0 %v2412
  %2465 = vmatpush.bf16.msra.mxu0 %v2411
  %2466 = vmatpush.bf16.msra.mxu0 %v2410
  %2467 = vmatpush.bf16.msra.mxu0 %v2409
  %2468 = vmatpush.bf16.msra.mxu0 %v2408
  %2469 = vmatmul.bf16.gmra.mxu0 %v2293
  %v2470 = vpop.f32.mrf.mxu0
  %v2471 = vadd.f32 %v2442, %v2470
  %v2472 = vpop.f32.mrf.mxu0
  %v2473 = vadd.f32 %v2444, %v2472
  %2474 = vmatmul.bf16.gmra.mxu0 %v2295
  %v2475 = vpop.f32.mrf.mxu0
  %v2476 = vadd.f32 %v2447, %v2475
  %v2477 = vpop.f32.mrf.mxu0
  %v2478 = vadd.f32 %v2449, %v2477
  %2479 = vmatmul.bf16.gmra.mxu0 %v2297
  %v2480 = vpop.f32.mrf.mxu0
  %v2481 = vadd.f32 %v2452, %v2480
  %v2482 = vpop.f32.mrf.mxu0
  %v2483 = vadd.f32 %v2454, %v2482
  %2484 = vmatmul.bf16.gmra.mxu0 %v2299
  %v2485 = vpop.f32.mrf.mxu0
  %v2486 = vadd.f32 %v2457, %v2485
  %v2487 = vpop.f32.mrf.mxu0
  %v2488 = vadd.f32 %v2459, %v2487
  %2489 = vdwg.mxu0
  %2490 = vst.msk [vmem:[%s5] sm:$0xff] %vm113, %v2471
  %2491 = vst.msk [vmem:[%s5 + $0x8] sm:$0xff] %vm113, %v2473
  %2492 = vst.msk [vmem:[%s5 + $0x10] sm:$0xff] %vm113, %v2476
  %2493 = vst.msk [vmem:[%s5 + $0x18] sm:$0xff] %vm113, %v2478
  %2494 = vst.msk [vmem:[%s5 + $0x20] sm:$0xff] %vm113, %v2481
  %2495 = vst.msk [vmem:[%s5 + $0x28] sm:$0xff] %vm113, %v2483
  %2496 = vst.msk [vmem:[%s5 + $0x30] sm:$0xff] %vm113, %v2486
  %2497 = vst.msk [vmem:[%s5 + $0x38] sm:$0xff] %vm113, %v2488
  // Predicated region
  $region26: #{rnn_forward.1} parent=0 // pred_check
    _
  $region27: #{rnn_forward.1} parent=0 // pred_check_branch
    %2499 = sbr.rel (0) target = $region29
  $region28: #{rnn_forward.1} parent=0 // pred_region
    _
  $region29: #{rnn_forward.1} parent=0 // pred_fallthru
    _
  // Predicated region
  $region30: #{rnn_forward.1} parent=0 // pred_check
    _
  $region31: #{rnn_forward.1} parent=0 // pred_check_branch
    %2501 = sbr.rel (0) target = $region33
  $region32: #{rnn_forward.1} parent=0 // pred_region
    _
  $region33: #{rnn_forward.1} parent=0 // pred_fallthru
    _

</llo_original>
